<compile_context>
chip_gen: v6e
topology: v6e:2x2x1
jax: 0.10.0
libtpu: 0.0.40
codegen_flags: <defaults>
</compile_context>

<pallas_src>
import functools

import jax
import jax.numpy as jnp
from jax.experimental import pallas as pl
from jax.experimental.pallas import tpu as pltpu


def _spatial_attention_kernel(x_ref, w_ref, o_ref, pm_ref, *, K, H, W):
    # x_ref : (NB, C, H, W)   VMEM  -- unpadded input block
    # w_ref : (2*K*K,)        SMEM  -- conv weights, avg-path pre-scaled by 1/C
    # o_ref : (NB, H, W)      VMEM  -- sigmoid(conv) output block
    # pm_ref: (2, NB, Hp, Wp) VMEM scratch -- zero-padded [sum, max] maps
    pad = K // 2
    x = x_ref[...]

    # Channel reduction. 1/C of the mean is folded into the avg-path weights on
    # the host, so a plain channel-sum suffices (saves a full-map multiply).
    # (Input is f32 here; the astype is a no-op and keeps the MACs in f32.)
    s = jnp.sum(x, axis=1).astype(jnp.float32)   # (NB, H, W)
    m = jnp.max(x, axis=1).astype(jnp.float32)   # (NB, H, W)

    # Build the spatially zero-padded maps in VMEM scratch (the wrapper no
    # longer pads x in HBM). Re-zero every step so the halo stays correct even
    # when the parallel batch axis is sharded across TensorCores (v7x); the
    # scratch is only a few KiB so this costs a handful of vector stores.
    pm_ref[...] = jnp.zeros_like(pm_ref)
    pm_ref[0, :, pad:pad + H, pad:pad + W] = s
    pm_ref[1, :, pad:pad + H, pad:pad + W] = m

    # 2 x K x K conv as scalar-weight MACs. The lane-direction (dw) shift is
    # hoisted: one lane-offset column load per (channel, dw) -- 2*K loads
    # instead of 2*K*K -- and the inner dh loop only takes cheap sublane
    # slices of that column. K is small and static, and NB is capped by the
    # wrapper, so the Python unroll keeps vreg pressure bounded.
    acc = jnp.zeros(o_ref.shape, jnp.float32)
    for dw in range(K):
        for c in range(2):
            col = pm_ref[c, :, :, dw:dw + W]          # (NB, Hp, W) lane-shifted
            for dh in range(K):
                wv = w_ref[c * K * K + dh * K + dw]   # scalar from SMEM
                acc = acc + wv * col[:, dh:dh + H, :]

    # Exact sigmoid keeps 1e-5 parity with the XLA reference; the divide on a
    # couple of vregs is negligible next to the input DMA.
    o_ref[...] = jax.nn.sigmoid(acc).astype(o_ref.dtype)


def _pick_batch_block(N, per_batch_bytes, budget_bytes):
    """Largest divisor of N whose per-step working set fits the budget, while
    keeping >=2 grid steps when N >= 2 so both v7x TensorCores get work."""
    cap = max(1, budget_bytes // max(1, per_batch_bytes))
    if N >= 2:
        cap = min(cap, N // 2)
    cap = min(cap, N)
    nb = 1
    for d in range(1, cap + 1):
        if N % d == 0:
            nb = d
    return nb


def spatial_attention(x, weight, kernel_size=7):
    """x: (N, C, H, W) f32, weight: (1, 2, K, K) f32 -> (N, 1, H, W) f32."""
    N, C, H, W = x.shape
    K = kernel_size
    pad = K // 2
    Hp, Wp = H + 2 * pad, W + 2 * pad

    # Fold the 1/C of the channel-mean into the avg-path conv weights so the
    # kernel only needs a channel-sum. Flatten to index c*K*K + dh*K + dw.
    w = weight.astype(jnp.float32)
    w = w.at[:, 0].multiply(1.0 / C)
    w_flat = w.reshape(-1)

    # Batch-block size: amortize the ~0.35us per-grid-step overhead with larger
    # input DMAs while staying far below per-core VMEM (64 MiB on v7x,
    # 128 MiB on v5e/v6e) once double-buffering is accounted for.
    try:
        vmem_cap = pltpu.get_tpu_info().vmem_capacity_bytes
    except Exception:  # conservative fallback (v7x per-TC capacity)
        vmem_cap = 64 << 20
    budget = max(1 << 20, vmem_cap // 32)
    per_batch_ws = 4 * (2 * C * H * W + 2 * H * W + 2 * Hp * Wp)
    NB = _pick_batch_block(N, per_batch_ws, budget)

    block_in = NB * C * H * W * 4
    block_out = NB * H * W * 4
    scratch_b = 2 * NB * Hp * Wp * 4
    vmem_need = 2 * (block_in + block_out) + scratch_b
    vmem_limit = int(min(max(2 * vmem_need, 16 << 20), 64 << 20))

    kernel = functools.partial(_spatial_attention_kernel, K=K, H=H, W=W)
    out = pl.pallas_call(
        kernel,
        out_shape=jax.ShapeDtypeStruct((N, H, W), jnp.float32),
        grid=(N // NB,),
        in_specs=[
            pl.BlockSpec((NB, C, H, W), lambda n: (n, 0, 0, 0)),
            pl.BlockSpec(memory_space=pltpu.MemorySpace.SMEM),
        ],
        out_specs=pl.BlockSpec((NB, H, W), lambda n: (n, 0, 0)),
        scratch_shapes=[pltpu.VMEM((2, NB, Hp, Wp), jnp.float32)],
        compiler_params=pltpu.CompilerParams(
            dimension_semantics=("parallel",),
            vmem_limit_bytes=vmem_limit),
    )(x, w_flat)
    # Note: a lane-dense (N, H*W) output layout was evaluated, but at W=16 the
    # in-kernel (H,W)->(H*W) relayout costs more than the ~1 KiB/step writeback
    # it would save; the reshape to NCHW is wrapper-side glue.
    return out.reshape(N, 1, H, W)


def ref_spatial_attention(x, weight, kernel_size=7):
    """Pure-JAX reference matching the PyTorch forward semantics."""
    pad = kernel_size // 2
    avg = jnp.mean(x, axis=1, keepdims=True)
    mx = jnp.max(x, axis=1, keepdims=True)
    f = jnp.concatenate([avg, mx], axis=1)
    out = jax.lax.conv_general_dilated(
        f, weight, window_strides=(1, 1),
        padding=[(pad, pad), (pad, pad)],
        dimension_numbers=("NCHW", "OIHW", "NCHW"))
    return jax.nn.sigmoid(out)


if __name__ == "__main__":
    key = jax.random.PRNGKey(0)
    kx, kw = jax.random.split(key)

    N, C, H, W = 2, 4, 16, 16
    K = 7
    x = jax.random.normal(kx, (N, C, H, W), dtype=jnp.float32)

    # Deterministic conv weight init (Conv2d(2, 1, 7, bias=False) shape),
    # kaiming-uniform-like bound; synthetic, not a checkpoint load.
    fan_in = 2 * K * K
    bound = 1.0 / (fan_in ** 0.5)
    weight = jax.random.uniform(kw, (1, 2, K, K), minval=-bound, maxval=bound,
                                dtype=jnp.float32)

    out = jax.block_until_ready(spatial_attention(x, weight, K))
    ref = ref_spatial_attention(x, weight, K)

    assert out.shape == (N, 1, H, W), out.shape
    assert jnp.allclose(out, ref, atol=1e-5, rtol=1e-5), \
        float(jnp.max(jnp.abs(out - ref)))
    print("KERNEL_OK")
</pallas_src>

<mosaic_0001>
module attributes {stable_mosaic.version = 11 : i64} {
  func.func @_spatial_attention_kernel(%arg0: i32, %arg1: memref<1x4x16x16xf32, #tpu.memory_space<vmem>>, %arg2: memref<98xf32, #tpu.memory_space<smem>>, %arg3: memref<1x16x16xf32, #tpu.memory_space<vmem>>, %arg4: memref<2x1x22x22xf32, #tpu.memory_space<vmem>>) attributes {dimension_semantics = [#tpu.dimension_semantics<parallel>], iteration_bounds = array<i64: 2>, scalar_prefetch = 0 : i64, scratch_operands = 1 : i64, tpu.core_type = #tpu.core_type<tc>, window_params = [{transform_indices = @transform_0, window_bounds = array<i64: 1, 4, 16, 16>}, {transform_indices = @transform_1, window_bounds = array<i64: 98>}, {transform_indices = @transform_2, window_bounds = array<i64: 1, 16, 16>}]} {
    %c0 = arith.constant 0 : index
    %c0_0 = arith.constant 0 : index
    %c0_1 = arith.constant 0 : index
    %c0_2 = arith.constant 0 : index
    %0 = vector.load %arg1[%c0, %c0_0, %c0_1, %c0_2] : memref<1x4x16x16xf32, #tpu.memory_space<vmem>>, vector<1x4x16x16xf32>
    %cst = arith.constant dense<0.000000e+00> : vector<1x16x16xf32>
    %1 = vector.multi_reduction <add>, %0, %cst [1] : vector<1x4x16x16xf32> to vector<1x16x16xf32>
    %cst_3 = arith.constant dense<0xFF800000> : vector<1x16x16xf32>
    %2 = vector.multi_reduction <maximumf>, %0, %cst_3 [1] : vector<1x4x16x16xf32> to vector<1x16x16xf32>
    %cst_4 = arith.constant 0.000000e+00 : f32
    %3 = vector.broadcast %cst_4 : f32 to vector<2x1x22x22xf32>
    %c0_5 = arith.constant 0 : index
    %c0_6 = arith.constant 0 : index
    %c0_7 = arith.constant 0 : index
    %c0_8 = arith.constant 0 : index
    %4 = vector.load %arg4[%c0_5, %c0_6, %c0_7, %c0_8] : memref<2x1x22x22xf32, #tpu.memory_space<vmem>>, vector<2x1x22x22xf32>
    tpu.vector_store %arg4[%c0_5, %c0_6, %c0_7, %c0_8], %3 {strides = array<i32>} : memref<2x1x22x22xf32, #tpu.memory_space<vmem>>, vector<2x1x22x22xf32>,
    %c0_9 = arith.constant 0 : index
    %c0_10 = arith.constant 0 : index
    %c3 = arith.constant 3 : index
    %c3_11 = arith.constant 3 : index
    %5 = vector.load %arg4[%c0_9, %c0_10, %c3, %c3_11] : memref<2x1x22x22xf32, #tpu.memory_space<vmem>>, vector<1x1x16x16xf32>
    %6 = vector.shape_cast %5 : vector<1x1x16x16xf32> to vector<1x16x16xf32>
    %7 = vector.shape_cast %1 : vector<1x16x16xf32> to vector<1x1x16x16xf32>
    tpu.vector_store %arg4[%c0_9, %c0_10, %c3, %c3_11], %7 {strides = array<i32>} : memref<2x1x22x22xf32, #tpu.memory_space<vmem>>, vector<1x1x16x16xf32>,
    %c1 = arith.constant 1 : index
    %c0_12 = arith.constant 0 : index
    %c3_13 = arith.constant 3 : index
    %c3_14 = arith.constant 3 : index
    %8 = vector.load %arg4[%c1, %c0_12, %c3_13, %c3_14] : memref<2x1x22x22xf32, #tpu.memory_space<vmem>>, vector<1x1x16x16xf32>
    %9 = vector.shape_cast %8 : vector<1x1x16x16xf32> to vector<1x16x16xf32>
    %10 = vector.shape_cast %2 : vector<1x16x16xf32> to vector<1x1x16x16xf32>
    tpu.vector_store %arg4[%c1, %c0_12, %c3_13, %c3_14], %10 {strides = array<i32>} : memref<2x1x22x22xf32, #tpu.memory_space<vmem>>, vector<1x1x16x16xf32>,
    %cst_15 = arith.constant 0.000000e+00 : f32
    %11 = vector.broadcast %cst_15 : f32 to vector<1x16x16xf32>
    %c0_16 = arith.constant 0 : index
    %c0_17 = arith.constant 0 : index
    %c0_18 = arith.constant 0 : index
    %c0_19 = arith.constant 0 : index
    %12 = vector.load %arg4[%c0_16, %c0_17, %c0_18, %c0_19] : memref<2x1x22x22xf32, #tpu.memory_space<vmem>>, vector<1x1x22x16xf32>
    %13 = vector.shape_cast %12 : vector<1x1x22x16xf32> to vector<1x22x16xf32>
    %c0_20 = arith.constant 0 : index
    %14 = memref.load %arg2[%c0_20] : memref<98xf32, #tpu.memory_space<smem>>
    %15 = vector.extract_strided_slice %13 {offsets = [0, 0, 0], sizes = [1, 16, 16], strides = [1, 1, 1]} : vector<1x22x16xf32> to vector<1x16x16xf32>
    %16 = vector.broadcast %14 : f32 to vector<1x16x16xf32>
    %17 = arith.mulf %16, %15 : vector<1x16x16xf32>
    %18 = arith.addf %11, %17 : vector<1x16x16xf32>
    %c7 = arith.constant 7 : index
    %19 = memref.load %arg2[%c7] : memref<98xf32, #tpu.memory_space<smem>>
    %20 = vector.extract_strided_slice %13 {offsets = [0, 1, 0], sizes = [1, 16, 16], strides = [1, 1, 1]} : vector<1x22x16xf32> to vector<1x16x16xf32>
    %21 = vector.broadcast %19 : f32 to vector<1x16x16xf32>
    %22 = arith.mulf %21, %20 : vector<1x16x16xf32>
    %23 = arith.addf %18, %22 : vector<1x16x16xf32>
    %c14 = arith.constant 14 : index
    %24 = memref.load %arg2[%c14] : memref<98xf32, #tpu.memory_space<smem>>
    %25 = vector.extract_strided_slice %13 {offsets = [0, 2, 0], sizes = [1, 16, 16], strides = [1, 1, 1]} : vector<1x22x16xf32> to vector<1x16x16xf32>
    %26 = vector.broadcast %24 : f32 to vector<1x16x16xf32>
    %27 = arith.mulf %26, %25 : vector<1x16x16xf32>
    %28 = arith.addf %23, %27 : vector<1x16x16xf32>
    %c21 = arith.constant 21 : index
    %29 = memref.load %arg2[%c21] : memref<98xf32, #tpu.memory_space<smem>>
    %30 = vector.extract_strided_slice %13 {offsets = [0, 3, 0], sizes = [1, 16, 16], strides = [1, 1, 1]} : vector<1x22x16xf32> to vector<1x16x16xf32>
    %31 = vector.broadcast %29 : f32 to vector<1x16x16xf32>
    %32 = arith.mulf %31, %30 : vector<1x16x16xf32>
    %33 = arith.addf %28, %32 : vector<1x16x16xf32>
    %c28 = arith.constant 28 : index
    %34 = memref.load %arg2[%c28] : memref<98xf32, #tpu.memory_space<smem>>
    %35 = vector.extract_strided_slice %13 {offsets = [0, 4, 0], sizes = [1, 16, 16], strides = [1, 1, 1]} : vector<1x22x16xf32> to vector<1x16x16xf32>
    %36 = vector.broadcast %34 : f32 to vector<1x16x16xf32>
    %37 = arith.mulf %36, %35 : vector<1x16x16xf32>
    %38 = arith.addf %33, %37 : vector<1x16x16xf32>
    %c35 = arith.constant 35 : index
    %39 = memref.load %arg2[%c35] : memref<98xf32, #tpu.memory_space<smem>>
    %40 = vector.extract_strided_slice %13 {offsets = [0, 5, 0], sizes = [1, 16, 16], strides = [1, 1, 1]} : vector<1x22x16xf32> to vector<1x16x16xf32>
    %41 = vector.broadcast %39 : f32 to vector<1x16x16xf32>
    %42 = arith.mulf %41, %40 : vector<1x16x16xf32>
    %43 = arith.addf %38, %42 : vector<1x16x16xf32>
    %c42 = arith.constant 42 : index
    %44 = memref.load %arg2[%c42] : memref<98xf32, #tpu.memory_space<smem>>
    %45 = vector.extract_strided_slice %13 {offsets = [0, 6, 0], sizes = [1, 16, 16], strides = [1, 1, 1]} : vector<1x22x16xf32> to vector<1x16x16xf32>
    %46 = vector.broadcast %44 : f32 to vector<1x16x16xf32>
    %47 = arith.mulf %46, %45 : vector<1x16x16xf32>
    %48 = arith.addf %43, %47 : vector<1x16x16xf32>
    %c1_21 = arith.constant 1 : index
    %c0_22 = arith.constant 0 : index
    %c0_23 = arith.constant 0 : index
    %c0_24 = arith.constant 0 : index
    %49 = vector.load %arg4[%c1_21, %c0_22, %c0_23, %c0_24] : memref<2x1x22x22xf32, #tpu.memory_space<vmem>>, vector<1x1x22x16xf32>
    %50 = vector.shape_cast %49 : vector<1x1x22x16xf32> to vector<1x22x16xf32>
    %c49 = arith.constant 49 : index
    %51 = memref.load %arg2[%c49] : memref<98xf32, #tpu.memory_space<smem>>
    %52 = vector.extract_strided_slice %50 {offsets = [0, 0, 0], sizes = [1, 16, 16], strides = [1, 1, 1]} : vector<1x22x16xf32> to vector<1x16x16xf32>
    %53 = vector.broadcast %51 : f32 to vector<1x16x16xf32>
    %54 = arith.mulf %53, %52 : vector<1x16x16xf32>
    %55 = arith.addf %48, %54 : vector<1x16x16xf32>
    %c56 = arith.constant 56 : index
    %56 = memref.load %arg2[%c56] : memref<98xf32, #tpu.memory_space<smem>>
    %57 = vector.extract_strided_slice %50 {offsets = [0, 1, 0], sizes = [1, 16, 16], strides = [1, 1, 1]} : vector<1x22x16xf32> to vector<1x16x16xf32>
    %58 = vector.broadcast %56 : f32 to vector<1x16x16xf32>
    %59 = arith.mulf %58, %57 : vector<1x16x16xf32>
    %60 = arith.addf %55, %59 : vector<1x16x16xf32>
    %c63 = arith.constant 63 : index
    %61 = memref.load %arg2[%c63] : memref<98xf32, #tpu.memory_space<smem>>
    %62 = vector.extract_strided_slice %50 {offsets = [0, 2, 0], sizes = [1, 16, 16], strides = [1, 1, 1]} : vector<1x22x16xf32> to vector<1x16x16xf32>
    %63 = vector.broadcast %61 : f32 to vector<1x16x16xf32>
    %64 = arith.mulf %63, %62 : vector<1x16x16xf32>
    %65 = arith.addf %60, %64 : vector<1x16x16xf32>
    %c70 = arith.constant 70 : index
    %66 = memref.load %arg2[%c70] : memref<98xf32, #tpu.memory_space<smem>>
    %67 = vector.extract_strided_slice %50 {offsets = [0, 3, 0], sizes = [1, 16, 16], strides = [1, 1, 1]} : vector<1x22x16xf32> to vector<1x16x16xf32>
    %68 = vector.broadcast %66 : f32 to vector<1x16x16xf32>
    %69 = arith.mulf %68, %67 : vector<1x16x16xf32>
    %70 = arith.addf %65, %69 : vector<1x16x16xf32>
    %c77 = arith.constant 77 : index
    %71 = memref.load %arg2[%c77] : memref<98xf32, #tpu.memory_space<smem>>
    %72 = vector.extract_strided_slice %50 {offsets = [0, 4, 0], sizes = [1, 16, 16], strides = [1, 1, 1]} : vector<1x22x16xf32> to vector<1x16x16xf32>
    %73 = vector.broadcast %71 : f32 to vector<1x16x16xf32>
    %74 = arith.mulf %73, %72 : vector<1x16x16xf32>
    %75 = arith.addf %70, %74 : vector<1x16x16xf32>
    %c84 = arith.constant 84 : index
    %76 = memref.load %arg2[%c84] : memref<98xf32, #tpu.memory_space<smem>>
    %77 = vector.extract_strided_slice %50 {offsets = [0, 5, 0], sizes = [1, 16, 16], strides = [1, 1, 1]} : vector<1x22x16xf32> to vector<1x16x16xf32>
    %78 = vector.broadcast %76 : f32 to vector<1x16x16xf32>
    %79 = arith.mulf %78, %77 : vector<1x16x16xf32>
    %80 = arith.addf %75, %79 : vector<1x16x16xf32>
    %c91 = arith.constant 91 : index
    %81 = memref.load %arg2[%c91] : memref<98xf32, #tpu.memory_space<smem>>
    %82 = vector.extract_strided_slice %50 {offsets = [0, 6, 0], sizes = [1, 16, 16], strides = [1, 1, 1]} : vector<1x22x16xf32> to vector<1x16x16xf32>
    %83 = vector.broadcast %81 : f32 to vector<1x16x16xf32>
    %84 = arith.mulf %83, %82 : vector<1x16x16xf32>
    %85 = arith.addf %80, %84 : vector<1x16x16xf32>
    %c0_25 = arith.constant 0 : index
    %c0_26 = arith.constant 0 : index
    %c0_27 = arith.constant 0 : index
    %c1_28 = arith.constant 1 : index
    %86 = vector.load %arg4[%c0_25, %c0_26, %c0_27, %c1_28] : memref<2x1x22x22xf32, #tpu.memory_space<vmem>>, vector<1x1x22x16xf32>
    %87 = vector.shape_cast %86 : vector<1x1x22x16xf32> to vector<1x22x16xf32>
    %c1_29 = arith.constant 1 : index
    %88 = memref.load %arg2[%c1_29] : memref<98xf32, #tpu.memory_space<smem>>
    %89 = vector.extract_strided_slice %87 {offsets = [0, 0, 0], sizes = [1, 16, 16], strides = [1, 1, 1]} : vector<1x22x16xf32> to vector<1x16x16xf32>
    %90 = vector.broadcast %88 : f32 to vector<1x16x16xf32>
    %91 = arith.mulf %90, %89 : vector<1x16x16xf32>
    %92 = arith.addf %85, %91 : vector<1x16x16xf32>
    %c8 = arith.constant 8 : index
    %93 = memref.load %arg2[%c8] : memref<98xf32, #tpu.memory_space<smem>>
    %94 = vector.extract_strided_slice %87 {offsets = [0, 1, 0], sizes = [1, 16, 16], strides = [1, 1, 1]} : vector<1x22x16xf32> to vector<1x16x16xf32>
    %95 = vector.broadcast %93 : f32 to vector<1x16x16xf32>
    %96 = arith.mulf %95, %94 : vector<1x16x16xf32>
    %97 = arith.addf %92, %96 : vector<1x16x16xf32>
    %c15 = arith.constant 15 : index
    %98 = memref.load %arg2[%c15] : memref<98xf32, #tpu.memory_space<smem>>
    %99 = vector.extract_strided_slice %87 {offsets = [0, 2, 0], sizes = [1, 16, 16], strides = [1, 1, 1]} : vector<1x22x16xf32> to vector<1x16x16xf32>
    %100 = vector.broadcast %98 : f32 to vector<1x16x16xf32>
    %101 = arith.mulf %100, %99 : vector<1x16x16xf32>
    %102 = arith.addf %97, %101 : vector<1x16x16xf32>
    %c22 = arith.constant 22 : index
    %103 = memref.load %arg2[%c22] : memref<98xf32, #tpu.memory_space<smem>>
    %104 = vector.extract_strided_slice %87 {offsets = [0, 3, 0], sizes = [1, 16, 16], strides = [1, 1, 1]} : vector<1x22x16xf32> to vector<1x16x16xf32>
    %105 = vector.broadcast %103 : f32 to vector<1x16x16xf32>
    %106 = arith.mulf %105, %104 : vector<1x16x16xf32>
    %107 = arith.addf %102, %106 : vector<1x16x16xf32>
    %c29 = arith.constant 29 : index
    %108 = memref.load %arg2[%c29] : memref<98xf32, #tpu.memory_space<smem>>
    %109 = vector.extract_strided_slice %87 {offsets = [0, 4, 0], sizes = [1, 16, 16], strides = [1, 1, 1]} : vector<1x22x16xf32> to vector<1x16x16xf32>
    %110 = vector.broadcast %108 : f32 to vector<1x16x16xf32>
    %111 = arith.mulf %110, %109 : vector<1x16x16xf32>
    %112 = arith.addf %107, %111 : vector<1x16x16xf32>
    %c36 = arith.constant 36 : index
    %113 = memref.load %arg2[%c36] : memref<98xf32, #tpu.memory_space<smem>>
    %114 = vector.extract_strided_slice %87 {offsets = [0, 5, 0], sizes = [1, 16, 16], strides = [1, 1, 1]} : vector<1x22x16xf32> to vector<1x16x16xf32>
    %115 = vector.broadcast %113 : f32 to vector<1x16x16xf32>
    %116 = arith.mulf %115, %114 : vector<1x16x16xf32>
    %117 = arith.addf %112, %116 : vector<1x16x16xf32>
    %c43 = arith.constant 43 : index
    %118 = memref.load %arg2[%c43] : memref<98xf32, #tpu.memory_space<smem>>
    %119 = vector.extract_strided_slice %87 {offsets = [0, 6, 0], sizes = [1, 16, 16], strides = [1, 1, 1]} : vector<1x22x16xf32> to vector<1x16x16xf32>
    %120 = vector.broadcast %118 : f32 to vector<1x16x16xf32>
    %121 = arith.mulf %120, %119 : vector<1x16x16xf32>
    %122 = arith.addf %117, %121 : vector<1x16x16xf32>
    %c1_30 = arith.constant 1 : index
    %c0_31 = arith.constant 0 : index
    %c0_32 = arith.constant 0 : index
    %c1_33 = arith.constant 1 : index
    %123 = vector.load %arg4[%c1_30, %c0_31, %c0_32, %c1_33] : memref<2x1x22x22xf32, #tpu.memory_space<vmem>>, vector<1x1x22x16xf32>
    %124 = vector.shape_cast %123 : vector<1x1x22x16xf32> to vector<1x22x16xf32>
    %c50 = arith.constant 50 : index
    %125 = memref.load %arg2[%c50] : memref<98xf32, #tpu.memory_space<smem>>
    %126 = vector.extract_strided_slice %124 {offsets = [0, 0, 0], sizes = [1, 16, 16], strides = [1, 1, 1]} : vector<1x22x16xf32> to vector<1x16x16xf32>
    %127 = vector.broadcast %125 : f32 to vector<1x16x16xf32>
    %128 = arith.mulf %127, %126 : vector<1x16x16xf32>
    %129 = arith.addf %122, %128 : vector<1x16x16xf32>
    %c57 = arith.constant 57 : index
    %130 = memref.load %arg2[%c57] : memref<98xf32, #tpu.memory_space<smem>>
    %131 = vector.extract_strided_slice %124 {offsets = [0, 1, 0], sizes = [1, 16, 16], strides = [1, 1, 1]} : vector<1x22x16xf32> to vector<1x16x16xf32>
    %132 = vector.broadcast %130 : f32 to vector<1x16x16xf32>
    %133 = arith.mulf %132, %131 : vector<1x16x16xf32>
    %134 = arith.addf %129, %133 : vector<1x16x16xf32>
    %c64 = arith.constant 64 : index
    %135 = memref.load %arg2[%c64] : memref<98xf32, #tpu.memory_space<smem>>
    %136 = vector.extract_strided_slice %124 {offsets = [0, 2, 0], sizes = [1, 16, 16], strides = [1, 1, 1]} : vector<1x22x16xf32> to vector<1x16x16xf32>
    %137 = vector.broadcast %135 : f32 to vector<1x16x16xf32>
    %138 = arith.mulf %137, %136 : vector<1x16x16xf32>
    %139 = arith.addf %134, %138 : vector<1x16x16xf32>
    %c71 = arith.constant 71 : index
    %140 = memref.load %arg2[%c71] : memref<98xf32, #tpu.memory_space<smem>>
    %141 = vector.extract_strided_slice %124 {offsets = [0, 3, 0], sizes = [1, 16, 16], strides = [1, 1, 1]} : vector<1x22x16xf32> to vector<1x16x16xf32>
    %142 = vector.broadcast %140 : f32 to vector<1x16x16xf32>
    %143 = arith.mulf %142, %141 : vector<1x16x16xf32>
    %144 = arith.addf %139, %143 : vector<1x16x16xf32>
    %c78 = arith.constant 78 : index
    %145 = memref.load %arg2[%c78] : memref<98xf32, #tpu.memory_space<smem>>
    %146 = vector.extract_strided_slice %124 {offsets = [0, 4, 0], sizes = [1, 16, 16], strides = [1, 1, 1]} : vector<1x22x16xf32> to vector<1x16x16xf32>
    %147 = vector.broadcast %145 : f32 to vector<1x16x16xf32>
    %148 = arith.mulf %147, %146 : vector<1x16x16xf32>
    %149 = arith.addf %144, %148 : vector<1x16x16xf32>
    %c85 = arith.constant 85 : index
    %150 = memref.load %arg2[%c85] : memref<98xf32, #tpu.memory_space<smem>>
    %151 = vector.extract_strided_slice %124 {offsets = [0, 5, 0], sizes = [1, 16, 16], strides = [1, 1, 1]} : vector<1x22x16xf32> to vector<1x16x16xf32>
    %152 = vector.broadcast %150 : f32 to vector<1x16x16xf32>
    %153 = arith.mulf %152, %151 : vector<1x16x16xf32>
    %154 = arith.addf %149, %153 : vector<1x16x16xf32>
    %c92 = arith.constant 92 : index
    %155 = memref.load %arg2[%c92] : memref<98xf32, #tpu.memory_space<smem>>
    %156 = vector.extract_strided_slice %124 {offsets = [0, 6, 0], sizes = [1, 16, 16], strides = [1, 1, 1]} : vector<1x22x16xf32> to vector<1x16x16xf32>
    %157 = vector.broadcast %155 : f32 to vector<1x16x16xf32>
    %158 = arith.mulf %157, %156 : vector<1x16x16xf32>
    %159 = arith.addf %154, %158 : vector<1x16x16xf32>
    %c0_34 = arith.constant 0 : index
    %c0_35 = arith.constant 0 : index
    %c0_36 = arith.constant 0 : index
    %c2 = arith.constant 2 : index
    %160 = vector.load %arg4[%c0_34, %c0_35, %c0_36, %c2] : memref<2x1x22x22xf32, #tpu.memory_space<vmem>>, vector<1x1x22x16xf32>
    %161 = vector.shape_cast %160 : vector<1x1x22x16xf32> to vector<1x22x16xf32>
    %c2_37 = arith.constant 2 : index
    %162 = memref.load %arg2[%c2_37] : memref<98xf32, #tpu.memory_space<smem>>
    %163 = vector.extract_strided_slice %161 {offsets = [0, 0, 0], sizes = [1, 16, 16], strides = [1, 1, 1]} : vector<1x22x16xf32> to vector<1x16x16xf32>
    %164 = vector.broadcast %162 : f32 to vector<1x16x16xf32>
    %165 = arith.mulf %164, %163 : vector<1x16x16xf32>
    %166 = arith.addf %159, %165 : vector<1x16x16xf32>
    %c9 = arith.constant 9 : index
    %167 = memref.load %arg2[%c9] : memref<98xf32, #tpu.memory_space<smem>>
    %168 = vector.extract_strided_slice %161 {offsets = [0, 1, 0], sizes = [1, 16, 16], strides = [1, 1, 1]} : vector<1x22x16xf32> to vector<1x16x16xf32>
    %169 = vector.broadcast %167 : f32 to vector<1x16x16xf32>
    %170 = arith.mulf %169, %168 : vector<1x16x16xf32>
    %171 = arith.addf %166, %170 : vector<1x16x16xf32>
    %c16 = arith.constant 16 : index
    %172 = memref.load %arg2[%c16] : memref<98xf32, #tpu.memory_space<smem>>
    %173 = vector.extract_strided_slice %161 {offsets = [0, 2, 0], sizes = [1, 16, 16], strides = [1, 1, 1]} : vector<1x22x16xf32> to vector<1x16x16xf32>
    %174 = vector.broadcast %172 : f32 to vector<1x16x16xf32>
    %175 = arith.mulf %174, %173 : vector<1x16x16xf32>
    %176 = arith.addf %171, %175 : vector<1x16x16xf32>
    %c23 = arith.constant 23 : index
    %177 = memref.load %arg2[%c23] : memref<98xf32, #tpu.memory_space<smem>>
    %178 = vector.extract_strided_slice %161 {offsets = [0, 3, 0], sizes = [1, 16, 16], strides = [1, 1, 1]} : vector<1x22x16xf32> to vector<1x16x16xf32>
    %179 = vector.broadcast %177 : f32 to vector<1x16x16xf32>
    %180 = arith.mulf %179, %178 : vector<1x16x16xf32>
    %181 = arith.addf %176, %180 : vector<1x16x16xf32>
    %c30 = arith.constant 30 : index
    %182 = memref.load %arg2[%c30] : memref<98xf32, #tpu.memory_space<smem>>
    %183 = vector.extract_strided_slice %161 {offsets = [0, 4, 0], sizes = [1, 16, 16], strides = [1, 1, 1]} : vector<1x22x16xf32> to vector<1x16x16xf32>
    %184 = vector.broadcast %182 : f32 to vector<1x16x16xf32>
    %185 = arith.mulf %184, %183 : vector<1x16x16xf32>
    %186 = arith.addf %181, %185 : vector<1x16x16xf32>
    %c37 = arith.constant 37 : index
    %187 = memref.load %arg2[%c37] : memref<98xf32, #tpu.memory_space<smem>>
    %188 = vector.extract_strided_slice %161 {offsets = [0, 5, 0], sizes = [1, 16, 16], strides = [1, 1, 1]} : vector<1x22x16xf32> to vector<1x16x16xf32>
    %189 = vector.broadcast %187 : f32 to vector<1x16x16xf32>
    %190 = arith.mulf %189, %188 : vector<1x16x16xf32>
    %191 = arith.addf %186, %190 : vector<1x16x16xf32>
    %c44 = arith.constant 44 : index
    %192 = memref.load %arg2[%c44] : memref<98xf32, #tpu.memory_space<smem>>
    %193 = vector.extract_strided_slice %161 {offsets = [0, 6, 0], sizes = [1, 16, 16], strides = [1, 1, 1]} : vector<1x22x16xf32> to vector<1x16x16xf32>
    %194 = vector.broadcast %192 : f32 to vector<1x16x16xf32>
    %195 = arith.mulf %194, %193 : vector<1x16x16xf32>
    %196 = arith.addf %191, %195 : vector<1x16x16xf32>
    %c1_38 = arith.constant 1 : index
    %c0_39 = arith.constant 0 : index
    %c0_40 = arith.constant 0 : index
    %c2_41 = arith.constant 2 : index
    %197 = vector.load %arg4[%c1_38, %c0_39, %c0_40, %c2_41] : memref<2x1x22x22xf32, #tpu.memory_space<vmem>>, vector<1x1x22x16xf32>
    %198 = vector.shape_cast %197 : vector<1x1x22x16xf32> to vector<1x22x16xf32>
    %c51 = arith.constant 51 : index
    %199 = memref.load %arg2[%c51] : memref<98xf32, #tpu.memory_space<smem>>
    %200 = vector.extract_strided_slice %198 {offsets = [0, 0, 0], sizes = [1, 16, 16], strides = [1, 1, 1]} : vector<1x22x16xf32> to vector<1x16x16xf32>
    %201 = vector.broadcast %199 : f32 to vector<1x16x16xf32>
    %202 = arith.mulf %201, %200 : vector<1x16x16xf32>
    %203 = arith.addf %196, %202 : vector<1x16x16xf32>
    %c58 = arith.constant 58 : index
    %204 = memref.load %arg2[%c58] : memref<98xf32, #tpu.memory_space<smem>>
    %205 = vector.extract_strided_slice %198 {offsets = [0, 1, 0], sizes = [1, 16, 16], strides = [1, 1, 1]} : vector<1x22x16xf32> to vector<1x16x16xf32>
    %206 = vector.broadcast %204 : f32 to vector<1x16x16xf32>
    %207 = arith.mulf %206, %205 : vector<1x16x16xf32>
    %208 = arith.addf %203, %207 : vector<1x16x16xf32>
    %c65 = arith.constant 65 : index
    %209 = memref.load %arg2[%c65] : memref<98xf32, #tpu.memory_space<smem>>
    %210 = vector.extract_strided_slice %198 {offsets = [0, 2, 0], sizes = [1, 16, 16], strides = [1, 1, 1]} : vector<1x22x16xf32> to vector<1x16x16xf32>
    %211 = vector.broadcast %209 : f32 to vector<1x16x16xf32>
    %212 = arith.mulf %211, %210 : vector<1x16x16xf32>
    %213 = arith.addf %208, %212 : vector<1x16x16xf32>
    %c72 = arith.constant 72 : index
    %214 = memref.load %arg2[%c72] : memref<98xf32, #tpu.memory_space<smem>>
    %215 = vector.extract_strided_slice %198 {offsets = [0, 3, 0], sizes = [1, 16, 16], strides = [1, 1, 1]} : vector<1x22x16xf32> to vector<1x16x16xf32>
    %216 = vector.broadcast %214 : f32 to vector<1x16x16xf32>
    %217 = arith.mulf %216, %215 : vector<1x16x16xf32>
    %218 = arith.addf %213, %217 : vector<1x16x16xf32>
    %c79 = arith.constant 79 : index
    %219 = memref.load %arg2[%c79] : memref<98xf32, #tpu.memory_space<smem>>
    %220 = vector.extract_strided_slice %198 {offsets = [0, 4, 0], sizes = [1, 16, 16], strides = [1, 1, 1]} : vector<1x22x16xf32> to vector<1x16x16xf32>
    %221 = vector.broadcast %219 : f32 to vector<1x16x16xf32>
    %222 = arith.mulf %221, %220 : vector<1x16x16xf32>
    %223 = arith.addf %218, %222 : vector<1x16x16xf32>
    %c86 = arith.constant 86 : index
    %224 = memref.load %arg2[%c86] : memref<98xf32, #tpu.memory_space<smem>>
    %225 = vector.extract_strided_slice %198 {offsets = [0, 5, 0], sizes = [1, 16, 16], strides = [1, 1, 1]} : vector<1x22x16xf32> to vector<1x16x16xf32>
    %226 = vector.broadcast %224 : f32 to vector<1x16x16xf32>
    %227 = arith.mulf %226, %225 : vector<1x16x16xf32>
    %228 = arith.addf %223, %227 : vector<1x16x16xf32>
    %c93 = arith.constant 93 : index
    %229 = memref.load %arg2[%c93] : memref<98xf32, #tpu.memory_space<smem>>
    %230 = vector.extract_strided_slice %198 {offsets = [0, 6, 0], sizes = [1, 16, 16], strides = [1, 1, 1]} : vector<1x22x16xf32> to vector<1x16x16xf32>
    %231 = vector.broadcast %229 : f32 to vector<1x16x16xf32>
    %232 = arith.mulf %231, %230 : vector<1x16x16xf32>
    %233 = arith.addf %228, %232 : vector<1x16x16xf32>
    %c0_42 = arith.constant 0 : index
    %c0_43 = arith.constant 0 : index
    %c0_44 = arith.constant 0 : index
    %c3_45 = arith.constant 3 : index
    %234 = vector.load %arg4[%c0_42, %c0_43, %c0_44, %c3_45] : memref<2x1x22x22xf32, #tpu.memory_space<vmem>>, vector<1x1x22x16xf32>
    %235 = vector.shape_cast %234 : vector<1x1x22x16xf32> to vector<1x22x16xf32>
    %c3_46 = arith.constant 3 : index
    %236 = memref.load %arg2[%c3_46] : memref<98xf32, #tpu.memory_space<smem>>
    %237 = vector.extract_strided_slice %235 {offsets = [0, 0, 0], sizes = [1, 16, 16], strides = [1, 1, 1]} : vector<1x22x16xf32> to vector<1x16x16xf32>
    %238 = vector.broadcast %236 : f32 to vector<1x16x16xf32>
    %239 = arith.mulf %238, %237 : vector<1x16x16xf32>
    %240 = arith.addf %233, %239 : vector<1x16x16xf32>
    %c10 = arith.constant 10 : index
    %241 = memref.load %arg2[%c10] : memref<98xf32, #tpu.memory_space<smem>>
    %242 = vector.extract_strided_slice %235 {offsets = [0, 1, 0], sizes = [1, 16, 16], strides = [1, 1, 1]} : vector<1x22x16xf32> to vector<1x16x16xf32>
    %243 = vector.broadcast %241 : f32 to vector<1x16x16xf32>
    %244 = arith.mulf %243, %242 : vector<1x16x16xf32>
    %245 = arith.addf %240, %244 : vector<1x16x16xf32>
    %c17 = arith.constant 17 : index
    %246 = memref.load %arg2[%c17] : memref<98xf32, #tpu.memory_space<smem>>
    %247 = vector.extract_strided_slice %235 {offsets = [0, 2, 0], sizes = [1, 16, 16], strides = [1, 1, 1]} : vector<1x22x16xf32> to vector<1x16x16xf32>
    %248 = vector.broadcast %246 : f32 to vector<1x16x16xf32>
    %249 = arith.mulf %248, %247 : vector<1x16x16xf32>
    %250 = arith.addf %245, %249 : vector<1x16x16xf32>
    %c24 = arith.constant 24 : index
    %251 = memref.load %arg2[%c24] : memref<98xf32, #tpu.memory_space<smem>>
    %252 = vector.extract_strided_slice %235 {offsets = [0, 3, 0], sizes = [1, 16, 16], strides = [1, 1, 1]} : vector<1x22x16xf32> to vector<1x16x16xf32>
    %253 = vector.broadcast %251 : f32 to vector<1x16x16xf32>
    %254 = arith.mulf %253, %252 : vector<1x16x16xf32>
    %255 = arith.addf %250, %254 : vector<1x16x16xf32>
    %c31 = arith.constant 31 : index
    %256 = memref.load %arg2[%c31] : memref<98xf32, #tpu.memory_space<smem>>
    %257 = vector.extract_strided_slice %235 {offsets = [0, 4, 0], sizes = [1, 16, 16], strides = [1, 1, 1]} : vector<1x22x16xf32> to vector<1x16x16xf32>
    %258 = vector.broadcast %256 : f32 to vector<1x16x16xf32>
    %259 = arith.mulf %258, %257 : vector<1x16x16xf32>
    %260 = arith.addf %255, %259 : vector<1x16x16xf32>
    %c38 = arith.constant 38 : index
    %261 = memref.load %arg2[%c38] : memref<98xf32, #tpu.memory_space<smem>>
    %262 = vector.extract_strided_slice %235 {offsets = [0, 5, 0], sizes = [1, 16, 16], strides = [1, 1, 1]} : vector<1x22x16xf32> to vector<1x16x16xf32>
    %263 = vector.broadcast %261 : f32 to vector<1x16x16xf32>
    %264 = arith.mulf %263, %262 : vector<1x16x16xf32>
    %265 = arith.addf %260, %264 : vector<1x16x16xf32>
    %c45 = arith.constant 45 : index
    %266 = memref.load %arg2[%c45] : memref<98xf32, #tpu.memory_space<smem>>
    %267 = vector.extract_strided_slice %235 {offsets = [0, 6, 0], sizes = [1, 16, 16], strides = [1, 1, 1]} : vector<1x22x16xf32> to vector<1x16x16xf32>
    %268 = vector.broadcast %266 : f32 to vector<1x16x16xf32>
    %269 = arith.mulf %268, %267 : vector<1x16x16xf32>
    %270 = arith.addf %265, %269 : vector<1x16x16xf32>
    %c1_47 = arith.constant 1 : index
    %c0_48 = arith.constant 0 : index
    %c0_49 = arith.constant 0 : index
    %c3_50 = arith.constant 3 : index
    %271 = vector.load %arg4[%c1_47, %c0_48, %c0_49, %c3_50] : memref<2x1x22x22xf32, #tpu.memory_space<vmem>>, vector<1x1x22x16xf32>
    %272 = vector.shape_cast %271 : vector<1x1x22x16xf32> to vector<1x22x16xf32>
    %c52 = arith.constant 52 : index
    %273 = memref.load %arg2[%c52] : memref<98xf32, #tpu.memory_space<smem>>
    %274 = vector.extract_strided_slice %272 {offsets = [0, 0, 0], sizes = [1, 16, 16], strides = [1, 1, 1]} : vector<1x22x16xf32> to vector<1x16x16xf32>
    %275 = vector.broadcast %273 : f32 to vector<1x16x16xf32>
    %276 = arith.mulf %275, %274 : vector<1x16x16xf32>
    %277 = arith.addf %270, %276 : vector<1x16x16xf32>
    %c59 = arith.constant 59 : index
    %278 = memref.load %arg2[%c59] : memref<98xf32, #tpu.memory_space<smem>>
    %279 = vector.extract_strided_slice %272 {offsets = [0, 1, 0], sizes = [1, 16, 16], strides = [1, 1, 1]} : vector<1x22x16xf32> to vector<1x16x16xf32>
    %280 = vector.broadcast %278 : f32 to vector<1x16x16xf32>
    %281 = arith.mulf %280, %279 : vector<1x16x16xf32>
    %282 = arith.addf %277, %281 : vector<1x16x16xf32>
    %c66 = arith.constant 66 : index
    %283 = memref.load %arg2[%c66] : memref<98xf32, #tpu.memory_space<smem>>
    %284 = vector.extract_strided_slice %272 {offsets = [0, 2, 0], sizes = [1, 16, 16], strides = [1, 1, 1]} : vector<1x22x16xf32> to vector<1x16x16xf32>
    %285 = vector.broadcast %283 : f32 to vector<1x16x16xf32>
    %286 = arith.mulf %285, %284 : vector<1x16x16xf32>
    %287 = arith.addf %282, %286 : vector<1x16x16xf32>
    %c73 = arith.constant 73 : index
    %288 = memref.load %arg2[%c73] : memref<98xf32, #tpu.memory_space<smem>>
    %289 = vector.extract_strided_slice %272 {offsets = [0, 3, 0], sizes = [1, 16, 16], strides = [1, 1, 1]} : vector<1x22x16xf32> to vector<1x16x16xf32>
    %290 = vector.broadcast %288 : f32 to vector<1x16x16xf32>
    %291 = arith.mulf %290, %289 : vector<1x16x16xf32>
    %292 = arith.addf %287, %291 : vector<1x16x16xf32>
    %c80 = arith.constant 80 : index
    %293 = memref.load %arg2[%c80] : memref<98xf32, #tpu.memory_space<smem>>
    %294 = vector.extract_strided_slice %272 {offsets = [0, 4, 0], sizes = [1, 16, 16], strides = [1, 1, 1]} : vector<1x22x16xf32> to vector<1x16x16xf32>
    %295 = vector.broadcast %293 : f32 to vector<1x16x16xf32>
    %296 = arith.mulf %295, %294 : vector<1x16x16xf32>
    %297 = arith.addf %292, %296 : vector<1x16x16xf32>
    %c87 = arith.constant 87 : index
    %298 = memref.load %arg2[%c87] : memref<98xf32, #tpu.memory_space<smem>>
    %299 = vector.extract_strided_slice %272 {offsets = [0, 5, 0], sizes = [1, 16, 16], strides = [1, 1, 1]} : vector<1x22x16xf32> to vector<1x16x16xf32>
    %300 = vector.broadcast %298 : f32 to vector<1x16x16xf32>
    %301 = arith.mulf %300, %299 : vector<1x16x16xf32>
    %302 = arith.addf %297, %301 : vector<1x16x16xf32>
    %c94 = arith.constant 94 : index
    %303 = memref.load %arg2[%c94] : memref<98xf32, #tpu.memory_space<smem>>
    %304 = vector.extract_strided_slice %272 {offsets = [0, 6, 0], sizes = [1, 16, 16], strides = [1, 1, 1]} : vector<1x22x16xf32> to vector<1x16x16xf32>
    %305 = vector.broadcast %303 : f32 to vector<1x16x16xf32>
    %306 = arith.mulf %305, %304 : vector<1x16x16xf32>
    %307 = arith.addf %302, %306 : vector<1x16x16xf32>
    %c0_51 = arith.constant 0 : index
    %c0_52 = arith.constant 0 : index
    %c0_53 = arith.constant 0 : index
    %c4 = arith.constant 4 : index
    %308 = vector.load %arg4[%c0_51, %c0_52, %c0_53, %c4] : memref<2x1x22x22xf32, #tpu.memory_space<vmem>>, vector<1x1x22x16xf32>
    %309 = vector.shape_cast %308 : vector<1x1x22x16xf32> to vector<1x22x16xf32>
    %c4_54 = arith.constant 4 : index
    %310 = memref.load %arg2[%c4_54] : memref<98xf32, #tpu.memory_space<smem>>
    %311 = vector.extract_strided_slice %309 {offsets = [0, 0, 0], sizes = [1, 16, 16], strides = [1, 1, 1]} : vector<1x22x16xf32> to vector<1x16x16xf32>
    %312 = vector.broadcast %310 : f32 to vector<1x16x16xf32>
    %313 = arith.mulf %312, %311 : vector<1x16x16xf32>
    %314 = arith.addf %307, %313 : vector<1x16x16xf32>
    %c11 = arith.constant 11 : index
    %315 = memref.load %arg2[%c11] : memref<98xf32, #tpu.memory_space<smem>>
    %316 = vector.extract_strided_slice %309 {offsets = [0, 1, 0], sizes = [1, 16, 16], strides = [1, 1, 1]} : vector<1x22x16xf32> to vector<1x16x16xf32>
    %317 = vector.broadcast %315 : f32 to vector<1x16x16xf32>
    %318 = arith.mulf %317, %316 : vector<1x16x16xf32>
    %319 = arith.addf %314, %318 : vector<1x16x16xf32>
    %c18 = arith.constant 18 : index
    %320 = memref.load %arg2[%c18] : memref<98xf32, #tpu.memory_space<smem>>
    %321 = vector.extract_strided_slice %309 {offsets = [0, 2, 0], sizes = [1, 16, 16], strides = [1, 1, 1]} : vector<1x22x16xf32> to vector<1x16x16xf32>
    %322 = vector.broadcast %320 : f32 to vector<1x16x16xf32>
    %323 = arith.mulf %322, %321 : vector<1x16x16xf32>
    %324 = arith.addf %319, %323 : vector<1x16x16xf32>
    %c25 = arith.constant 25 : index
    %325 = memref.load %arg2[%c25] : memref<98xf32, #tpu.memory_space<smem>>
    %326 = vector.extract_strided_slice %309 {offsets = [0, 3, 0], sizes = [1, 16, 16], strides = [1, 1, 1]} : vector<1x22x16xf32> to vector<1x16x16xf32>
    %327 = vector.broadcast %325 : f32 to vector<1x16x16xf32>
    %328 = arith.mulf %327, %326 : vector<1x16x16xf32>
    %329 = arith.addf %324, %328 : vector<1x16x16xf32>
    %c32 = arith.constant 32 : index
    %330 = memref.load %arg2[%c32] : memref<98xf32, #tpu.memory_space<smem>>
    %331 = vector.extract_strided_slice %309 {offsets = [0, 4, 0], sizes = [1, 16, 16], strides = [1, 1, 1]} : vector<1x22x16xf32> to vector<1x16x16xf32>
    %332 = vector.broadcast %330 : f32 to vector<1x16x16xf32>
    %333 = arith.mulf %332, %331 : vector<1x16x16xf32>
    %334 = arith.addf %329, %333 : vector<1x16x16xf32>
    %c39 = arith.constant 39 : index
    %335 = memref.load %arg2[%c39] : memref<98xf32, #tpu.memory_space<smem>>
    %336 = vector.extract_strided_slice %309 {offsets = [0, 5, 0], sizes = [1, 16, 16], strides = [1, 1, 1]} : vector<1x22x16xf32> to vector<1x16x16xf32>
    %337 = vector.broadcast %335 : f32 to vector<1x16x16xf32>
    %338 = arith.mulf %337, %336 : vector<1x16x16xf32>
    %339 = arith.addf %334, %338 : vector<1x16x16xf32>
    %c46 = arith.constant 46 : index
    %340 = memref.load %arg2[%c46] : memref<98xf32, #tpu.memory_space<smem>>
    %341 = vector.extract_strided_slice %309 {offsets = [0, 6, 0], sizes = [1, 16, 16], strides = [1, 1, 1]} : vector<1x22x16xf32> to vector<1x16x16xf32>
    %342 = vector.broadcast %340 : f32 to vector<1x16x16xf32>
    %343 = arith.mulf %342, %341 : vector<1x16x16xf32>
    %344 = arith.addf %339, %343 : vector<1x16x16xf32>
    %c1_55 = arith.constant 1 : index
    %c0_56 = arith.constant 0 : index
    %c0_57 = arith.constant 0 : index
    %c4_58 = arith.constant 4 : index
    %345 = vector.load %arg4[%c1_55, %c0_56, %c0_57, %c4_58] : memref<2x1x22x22xf32, #tpu.memory_space<vmem>>, vector<1x1x22x16xf32>
    %346 = vector.shape_cast %345 : vector<1x1x22x16xf32> to vector<1x22x16xf32>
    %c53 = arith.constant 53 : index
    %347 = memref.load %arg2[%c53] : memref<98xf32, #tpu.memory_space<smem>>
    %348 = vector.extract_strided_slice %346 {offsets = [0, 0, 0], sizes = [1, 16, 16], strides = [1, 1, 1]} : vector<1x22x16xf32> to vector<1x16x16xf32>
    %349 = vector.broadcast %347 : f32 to vector<1x16x16xf32>
    %350 = arith.mulf %349, %348 : vector<1x16x16xf32>
    %351 = arith.addf %344, %350 : vector<1x16x16xf32>
    %c60 = arith.constant 60 : index
    %352 = memref.load %arg2[%c60] : memref<98xf32, #tpu.memory_space<smem>>
    %353 = vector.extract_strided_slice %346 {offsets = [0, 1, 0], sizes = [1, 16, 16], strides = [1, 1, 1]} : vector<1x22x16xf32> to vector<1x16x16xf32>
    %354 = vector.broadcast %352 : f32 to vector<1x16x16xf32>
    %355 = arith.mulf %354, %353 : vector<1x16x16xf32>
    %356 = arith.addf %351, %355 : vector<1x16x16xf32>
    %c67 = arith.constant 67 : index
    %357 = memref.load %arg2[%c67] : memref<98xf32, #tpu.memory_space<smem>>
    %358 = vector.extract_strided_slice %346 {offsets = [0, 2, 0], sizes = [1, 16, 16], strides = [1, 1, 1]} : vector<1x22x16xf32> to vector<1x16x16xf32>
    %359 = vector.broadcast %357 : f32 to vector<1x16x16xf32>
    %360 = arith.mulf %359, %358 : vector<1x16x16xf32>
    %361 = arith.addf %356, %360 : vector<1x16x16xf32>
    %c74 = arith.constant 74 : index
    %362 = memref.load %arg2[%c74] : memref<98xf32, #tpu.memory_space<smem>>
    %363 = vector.extract_strided_slice %346 {offsets = [0, 3, 0], sizes = [1, 16, 16], strides = [1, 1, 1]} : vector<1x22x16xf32> to vector<1x16x16xf32>
    %364 = vector.broadcast %362 : f32 to vector<1x16x16xf32>
    %365 = arith.mulf %364, %363 : vector<1x16x16xf32>
    %366 = arith.addf %361, %365 : vector<1x16x16xf32>
    %c81 = arith.constant 81 : index
    %367 = memref.load %arg2[%c81] : memref<98xf32, #tpu.memory_space<smem>>
    %368 = vector.extract_strided_slice %346 {offsets = [0, 4, 0], sizes = [1, 16, 16], strides = [1, 1, 1]} : vector<1x22x16xf32> to vector<1x16x16xf32>
    %369 = vector.broadcast %367 : f32 to vector<1x16x16xf32>
    %370 = arith.mulf %369, %368 : vector<1x16x16xf32>
    %371 = arith.addf %366, %370 : vector<1x16x16xf32>
    %c88 = arith.constant 88 : index
    %372 = memref.load %arg2[%c88] : memref<98xf32, #tpu.memory_space<smem>>
    %373 = vector.extract_strided_slice %346 {offsets = [0, 5, 0], sizes = [1, 16, 16], strides = [1, 1, 1]} : vector<1x22x16xf32> to vector<1x16x16xf32>
    %374 = vector.broadcast %372 : f32 to vector<1x16x16xf32>
    %375 = arith.mulf %374, %373 : vector<1x16x16xf32>
    %376 = arith.addf %371, %375 : vector<1x16x16xf32>
    %c95 = arith.constant 95 : index
    %377 = memref.load %arg2[%c95] : memref<98xf32, #tpu.memory_space<smem>>
    %378 = vector.extract_strided_slice %346 {offsets = [0, 6, 0], sizes = [1, 16, 16], strides = [1, 1, 1]} : vector<1x22x16xf32> to vector<1x16x16xf32>
    %379 = vector.broadcast %377 : f32 to vector<1x16x16xf32>
    %380 = arith.mulf %379, %378 : vector<1x16x16xf32>
    %381 = arith.addf %376, %380 : vector<1x16x16xf32>
    %c0_59 = arith.constant 0 : index
    %c0_60 = arith.constant 0 : index
    %c0_61 = arith.constant 0 : index
    %c5 = arith.constant 5 : index
    %382 = vector.load %arg4[%c0_59, %c0_60, %c0_61, %c5] : memref<2x1x22x22xf32, #tpu.memory_space<vmem>>, vector<1x1x22x16xf32>
    %383 = vector.shape_cast %382 : vector<1x1x22x16xf32> to vector<1x22x16xf32>
    %c5_62 = arith.constant 5 : index
    %384 = memref.load %arg2[%c5_62] : memref<98xf32, #tpu.memory_space<smem>>
    %385 = vector.extract_strided_slice %383 {offsets = [0, 0, 0], sizes = [1, 16, 16], strides = [1, 1, 1]} : vector<1x22x16xf32> to vector<1x16x16xf32>
    %386 = vector.broadcast %384 : f32 to vector<1x16x16xf32>
    %387 = arith.mulf %386, %385 : vector<1x16x16xf32>
    %388 = arith.addf %381, %387 : vector<1x16x16xf32>
    %c12 = arith.constant 12 : index
    %389 = memref.load %arg2[%c12] : memref<98xf32, #tpu.memory_space<smem>>
    %390 = vector.extract_strided_slice %383 {offsets = [0, 1, 0], sizes = [1, 16, 16], strides = [1, 1, 1]} : vector<1x22x16xf32> to vector<1x16x16xf32>
    %391 = vector.broadcast %389 : f32 to vector<1x16x16xf32>
    %392 = arith.mulf %391, %390 : vector<1x16x16xf32>
    %393 = arith.addf %388, %392 : vector<1x16x16xf32>
    %c19 = arith.constant 19 : index
    %394 = memref.load %arg2[%c19] : memref<98xf32, #tpu.memory_space<smem>>
    %395 = vector.extract_strided_slice %383 {offsets = [0, 2, 0], sizes = [1, 16, 16], strides = [1, 1, 1]} : vector<1x22x16xf32> to vector<1x16x16xf32>
    %396 = vector.broadcast %394 : f32 to vector<1x16x16xf32>
    %397 = arith.mulf %396, %395 : vector<1x16x16xf32>
    %398 = arith.addf %393, %397 : vector<1x16x16xf32>
    %c26 = arith.constant 26 : index
    %399 = memref.load %arg2[%c26] : memref<98xf32, #tpu.memory_space<smem>>
    %400 = vector.extract_strided_slice %383 {offsets = [0, 3, 0], sizes = [1, 16, 16], strides = [1, 1, 1]} : vector<1x22x16xf32> to vector<1x16x16xf32>
    %401 = vector.broadcast %399 : f32 to vector<1x16x16xf32>
    %402 = arith.mulf %401, %400 : vector<1x16x16xf32>
    %403 = arith.addf %398, %402 : vector<1x16x16xf32>
    %c33 = arith.constant 33 : index
    %404 = memref.load %arg2[%c33] : memref<98xf32, #tpu.memory_space<smem>>
    %405 = vector.extract_strided_slice %383 {offsets = [0, 4, 0], sizes = [1, 16, 16], strides = [1, 1, 1]} : vector<1x22x16xf32> to vector<1x16x16xf32>
    %406 = vector.broadcast %404 : f32 to vector<1x16x16xf32>
    %407 = arith.mulf %406, %405 : vector<1x16x16xf32>
    %408 = arith.addf %403, %407 : vector<1x16x16xf32>
    %c40 = arith.constant 40 : index
    %409 = memref.load %arg2[%c40] : memref<98xf32, #tpu.memory_space<smem>>
    %410 = vector.extract_strided_slice %383 {offsets = [0, 5, 0], sizes = [1, 16, 16], strides = [1, 1, 1]} : vector<1x22x16xf32> to vector<1x16x16xf32>
    %411 = vector.broadcast %409 : f32 to vector<1x16x16xf32>
    %412 = arith.mulf %411, %410 : vector<1x16x16xf32>
    %413 = arith.addf %408, %412 : vector<1x16x16xf32>
    %c47 = arith.constant 47 : index
    %414 = memref.load %arg2[%c47] : memref<98xf32, #tpu.memory_space<smem>>
    %415 = vector.extract_strided_slice %383 {offsets = [0, 6, 0], sizes = [1, 16, 16], strides = [1, 1, 1]} : vector<1x22x16xf32> to vector<1x16x16xf32>
    %416 = vector.broadcast %414 : f32 to vector<1x16x16xf32>
    %417 = arith.mulf %416, %415 : vector<1x16x16xf32>
    %418 = arith.addf %413, %417 : vector<1x16x16xf32>
    %c1_63 = arith.constant 1 : index
    %c0_64 = arith.constant 0 : index
    %c0_65 = arith.constant 0 : index
    %c5_66 = arith.constant 5 : index
    %419 = vector.load %arg4[%c1_63, %c0_64, %c0_65, %c5_66] : memref<2x1x22x22xf32, #tpu.memory_space<vmem>>, vector<1x1x22x16xf32>
    %420 = vector.shape_cast %419 : vector<1x1x22x16xf32> to vector<1x22x16xf32>
    %c54 = arith.constant 54 : index
    %421 = memref.load %arg2[%c54] : memref<98xf32, #tpu.memory_space<smem>>
    %422 = vector.extract_strided_slice %420 {offsets = [0, 0, 0], sizes = [1, 16, 16], strides = [1, 1, 1]} : vector<1x22x16xf32> to vector<1x16x16xf32>
    %423 = vector.broadcast %421 : f32 to vector<1x16x16xf32>
    %424 = arith.mulf %423, %422 : vector<1x16x16xf32>
    %425 = arith.addf %418, %424 : vector<1x16x16xf32>
    %c61 = arith.constant 61 : index
    %426 = memref.load %arg2[%c61] : memref<98xf32, #tpu.memory_space<smem>>
    %427 = vector.extract_strided_slice %420 {offsets = [0, 1, 0], sizes = [1, 16, 16], strides = [1, 1, 1]} : vector<1x22x16xf32> to vector<1x16x16xf32>
    %428 = vector.broadcast %426 : f32 to vector<1x16x16xf32>
    %429 = arith.mulf %428, %427 : vector<1x16x16xf32>
    %430 = arith.addf %425, %429 : vector<1x16x16xf32>
    %c68 = arith.constant 68 : index
    %431 = memref.load %arg2[%c68] : memref<98xf32, #tpu.memory_space<smem>>
    %432 = vector.extract_strided_slice %420 {offsets = [0, 2, 0], sizes = [1, 16, 16], strides = [1, 1, 1]} : vector<1x22x16xf32> to vector<1x16x16xf32>
    %433 = vector.broadcast %431 : f32 to vector<1x16x16xf32>
    %434 = arith.mulf %433, %432 : vector<1x16x16xf32>
    %435 = arith.addf %430, %434 : vector<1x16x16xf32>
    %c75 = arith.constant 75 : index
    %436 = memref.load %arg2[%c75] : memref<98xf32, #tpu.memory_space<smem>>
    %437 = vector.extract_strided_slice %420 {offsets = [0, 3, 0], sizes = [1, 16, 16], strides = [1, 1, 1]} : vector<1x22x16xf32> to vector<1x16x16xf32>
    %438 = vector.broadcast %436 : f32 to vector<1x16x16xf32>
    %439 = arith.mulf %438, %437 : vector<1x16x16xf32>
    %440 = arith.addf %435, %439 : vector<1x16x16xf32>
    %c82 = arith.constant 82 : index
    %441 = memref.load %arg2[%c82] : memref<98xf32, #tpu.memory_space<smem>>
    %442 = vector.extract_strided_slice %420 {offsets = [0, 4, 0], sizes = [1, 16, 16], strides = [1, 1, 1]} : vector<1x22x16xf32> to vector<1x16x16xf32>
    %443 = vector.broadcast %441 : f32 to vector<1x16x16xf32>
    %444 = arith.mulf %443, %442 : vector<1x16x16xf32>
    %445 = arith.addf %440, %444 : vector<1x16x16xf32>
    %c89 = arith.constant 89 : index
    %446 = memref.load %arg2[%c89] : memref<98xf32, #tpu.memory_space<smem>>
    %447 = vector.extract_strided_slice %420 {offsets = [0, 5, 0], sizes = [1, 16, 16], strides = [1, 1, 1]} : vector<1x22x16xf32> to vector<1x16x16xf32>
    %448 = vector.broadcast %446 : f32 to vector<1x16x16xf32>
    %449 = arith.mulf %448, %447 : vector<1x16x16xf32>
    %450 = arith.addf %445, %449 : vector<1x16x16xf32>
    %c96 = arith.constant 96 : index
    %451 = memref.load %arg2[%c96] : memref<98xf32, #tpu.memory_space<smem>>
    %452 = vector.extract_strided_slice %420 {offsets = [0, 6, 0], sizes = [1, 16, 16], strides = [1, 1, 1]} : vector<1x22x16xf32> to vector<1x16x16xf32>
    %453 = vector.broadcast %451 : f32 to vector<1x16x16xf32>
    %454 = arith.mulf %453, %452 : vector<1x16x16xf32>
    %455 = arith.addf %450, %454 : vector<1x16x16xf32>
    %c0_67 = arith.constant 0 : index
    %c0_68 = arith.constant 0 : index
    %c0_69 = arith.constant 0 : index
    %c6 = arith.constant 6 : index
    %456 = vector.load %arg4[%c0_67, %c0_68, %c0_69, %c6] : memref<2x1x22x22xf32, #tpu.memory_space<vmem>>, vector<1x1x22x16xf32>
    %457 = vector.shape_cast %456 : vector<1x1x22x16xf32> to vector<1x22x16xf32>
    %c6_70 = arith.constant 6 : index
    %458 = memref.load %arg2[%c6_70] : memref<98xf32, #tpu.memory_space<smem>>
    %459 = vector.extract_strided_slice %457 {offsets = [0, 0, 0], sizes = [1, 16, 16], strides = [1, 1, 1]} : vector<1x22x16xf32> to vector<1x16x16xf32>
    %460 = vector.broadcast %458 : f32 to vector<1x16x16xf32>
    %461 = arith.mulf %460, %459 : vector<1x16x16xf32>
    %462 = arith.addf %455, %461 : vector<1x16x16xf32>
    %c13 = arith.constant 13 : index
    %463 = memref.load %arg2[%c13] : memref<98xf32, #tpu.memory_space<smem>>
    %464 = vector.extract_strided_slice %457 {offsets = [0, 1, 0], sizes = [1, 16, 16], strides = [1, 1, 1]} : vector<1x22x16xf32> to vector<1x16x16xf32>
    %465 = vector.broadcast %463 : f32 to vector<1x16x16xf32>
    %466 = arith.mulf %465, %464 : vector<1x16x16xf32>
    %467 = arith.addf %462, %466 : vector<1x16x16xf32>
    %c20 = arith.constant 20 : index
    %468 = memref.load %arg2[%c20] : memref<98xf32, #tpu.memory_space<smem>>
    %469 = vector.extract_strided_slice %457 {offsets = [0, 2, 0], sizes = [1, 16, 16], strides = [1, 1, 1]} : vector<1x22x16xf32> to vector<1x16x16xf32>
    %470 = vector.broadcast %468 : f32 to vector<1x16x16xf32>
    %471 = arith.mulf %470, %469 : vector<1x16x16xf32>
    %472 = arith.addf %467, %471 : vector<1x16x16xf32>
    %c27 = arith.constant 27 : index
    %473 = memref.load %arg2[%c27] : memref<98xf32, #tpu.memory_space<smem>>
    %474 = vector.extract_strided_slice %457 {offsets = [0, 3, 0], sizes = [1, 16, 16], strides = [1, 1, 1]} : vector<1x22x16xf32> to vector<1x16x16xf32>
    %475 = vector.broadcast %473 : f32 to vector<1x16x16xf32>
    %476 = arith.mulf %475, %474 : vector<1x16x16xf32>
    %477 = arith.addf %472, %476 : vector<1x16x16xf32>
    %c34 = arith.constant 34 : index
    %478 = memref.load %arg2[%c34] : memref<98xf32, #tpu.memory_space<smem>>
    %479 = vector.extract_strided_slice %457 {offsets = [0, 4, 0], sizes = [1, 16, 16], strides = [1, 1, 1]} : vector<1x22x16xf32> to vector<1x16x16xf32>
    %480 = vector.broadcast %478 : f32 to vector<1x16x16xf32>
    %481 = arith.mulf %480, %479 : vector<1x16x16xf32>
    %482 = arith.addf %477, %481 : vector<1x16x16xf32>
    %c41 = arith.constant 41 : index
    %483 = memref.load %arg2[%c41] : memref<98xf32, #tpu.memory_space<smem>>
    %484 = vector.extract_strided_slice %457 {offsets = [0, 5, 0], sizes = [1, 16, 16], strides = [1, 1, 1]} : vector<1x22x16xf32> to vector<1x16x16xf32>
    %485 = vector.broadcast %483 : f32 to vector<1x16x16xf32>
    %486 = arith.mulf %485, %484 : vector<1x16x16xf32>
    %487 = arith.addf %482, %486 : vector<1x16x16xf32>
    %c48 = arith.constant 48 : index
    %488 = memref.load %arg2[%c48] : memref<98xf32, #tpu.memory_space<smem>>
    %489 = vector.extract_strided_slice %457 {offsets = [0, 6, 0], sizes = [1, 16, 16], strides = [1, 1, 1]} : vector<1x22x16xf32> to vector<1x16x16xf32>
    %490 = vector.broadcast %488 : f32 to vector<1x16x16xf32>
    %491 = arith.mulf %490, %489 : vector<1x16x16xf32>
    %492 = arith.addf %487, %491 : vector<1x16x16xf32>
    %c1_71 = arith.constant 1 : index
    %c0_72 = arith.constant 0 : index
    %c0_73 = arith.constant 0 : index
    %c6_74 = arith.constant 6 : index
    %493 = vector.load %arg4[%c1_71, %c0_72, %c0_73, %c6_74] : memref<2x1x22x22xf32, #tpu.memory_space<vmem>>, vector<1x1x22x16xf32>
    %494 = vector.shape_cast %493 : vector<1x1x22x16xf32> to vector<1x22x16xf32>
    %c55 = arith.constant 55 : index
    %495 = memref.load %arg2[%c55] : memref<98xf32, #tpu.memory_space<smem>>
    %496 = vector.extract_strided_slice %494 {offsets = [0, 0, 0], sizes = [1, 16, 16], strides = [1, 1, 1]} : vector<1x22x16xf32> to vector<1x16x16xf32>
    %497 = vector.broadcast %495 : f32 to vector<1x16x16xf32>
    %498 = arith.mulf %497, %496 : vector<1x16x16xf32>
    %499 = arith.addf %492, %498 : vector<1x16x16xf32>
    %c62 = arith.constant 62 : index
    %500 = memref.load %arg2[%c62] : memref<98xf32, #tpu.memory_space<smem>>
    %501 = vector.extract_strided_slice %494 {offsets = [0, 1, 0], sizes = [1, 16, 16], strides = [1, 1, 1]} : vector<1x22x16xf32> to vector<1x16x16xf32>
    %502 = vector.broadcast %500 : f32 to vector<1x16x16xf32>
    %503 = arith.mulf %502, %501 : vector<1x16x16xf32>
    %504 = arith.addf %499, %503 : vector<1x16x16xf32>
    %c69 = arith.constant 69 : index
    %505 = memref.load %arg2[%c69] : memref<98xf32, #tpu.memory_space<smem>>
    %506 = vector.extract_strided_slice %494 {offsets = [0, 2, 0], sizes = [1, 16, 16], strides = [1, 1, 1]} : vector<1x22x16xf32> to vector<1x16x16xf32>
    %507 = vector.broadcast %505 : f32 to vector<1x16x16xf32>
    %508 = arith.mulf %507, %506 : vector<1x16x16xf32>
    %509 = arith.addf %504, %508 : vector<1x16x16xf32>
    %c76 = arith.constant 76 : index
    %510 = memref.load %arg2[%c76] : memref<98xf32, #tpu.memory_space<smem>>
    %511 = vector.extract_strided_slice %494 {offsets = [0, 3, 0], sizes = [1, 16, 16], strides = [1, 1, 1]} : vector<1x22x16xf32> to vector<1x16x16xf32>
    %512 = vector.broadcast %510 : f32 to vector<1x16x16xf32>
    %513 = arith.mulf %512, %511 : vector<1x16x16xf32>
    %514 = arith.addf %509, %513 : vector<1x16x16xf32>
    %c83 = arith.constant 83 : index
    %515 = memref.load %arg2[%c83] : memref<98xf32, #tpu.memory_space<smem>>
    %516 = vector.extract_strided_slice %494 {offsets = [0, 4, 0], sizes = [1, 16, 16], strides = [1, 1, 1]} : vector<1x22x16xf32> to vector<1x16x16xf32>
    %517 = vector.broadcast %515 : f32 to vector<1x16x16xf32>
    %518 = arith.mulf %517, %516 : vector<1x16x16xf32>
    %519 = arith.addf %514, %518 : vector<1x16x16xf32>
    %c90 = arith.constant 90 : index
    %520 = memref.load %arg2[%c90] : memref<98xf32, #tpu.memory_space<smem>>
    %521 = vector.extract_strided_slice %494 {offsets = [0, 5, 0], sizes = [1, 16, 16], strides = [1, 1, 1]} : vector<1x22x16xf32> to vector<1x16x16xf32>
    %522 = vector.broadcast %520 : f32 to vector<1x16x16xf32>
    %523 = arith.mulf %522, %521 : vector<1x16x16xf32>
    %524 = arith.addf %519, %523 : vector<1x16x16xf32>
    %c97 = arith.constant 97 : index
    %525 = memref.load %arg2[%c97] : memref<98xf32, #tpu.memory_space<smem>>
    %526 = vector.extract_strided_slice %494 {offsets = [0, 6, 0], sizes = [1, 16, 16], strides = [1, 1, 1]} : vector<1x22x16xf32> to vector<1x16x16xf32>
    %527 = vector.broadcast %525 : f32 to vector<1x16x16xf32>
    %528 = arith.mulf %527, %526 : vector<1x16x16xf32>
    %529 = arith.addf %524, %528 : vector<1x16x16xf32>
    %530 = arith.negf %529 : vector<1x16x16xf32>
    %531 = math.exp %530 : vector<1x16x16xf32>
    %cst_75 = arith.constant 1.000000e+00 : f32
    %532 = vector.broadcast %cst_75 : f32 to vector<1x16x16xf32>
    %533 = arith.addf %532, %531 : vector<1x16x16xf32>
    %534 = arith.divf %532, %533 : vector<1x16x16xf32>
    %c0_76 = arith.constant 0 : index
    %c0_77 = arith.constant 0 : index
    %c0_78 = arith.constant 0 : index
    %535 = vector.load %arg3[%c0_76, %c0_77, %c0_78] : memref<1x16x16xf32, #tpu.memory_space<vmem>>, vector<1x16x16xf32>
    tpu.vector_store %arg3[%c0_76, %c0_77, %c0_78], %534 {strides = array<i32>} : memref<1x16x16xf32, #tpu.memory_space<vmem>>, vector<1x16x16xf32>,
    return
  }
  func.func @transform_0(%arg0: i32) -> (i32, i32, i32, i32) {
    %c0_i32 = arith.constant 0 : i32
    %c0_i32_0 = arith.constant 0 : i32
    %c0_i32_1 = arith.constant 0 : i32
    %c0_i32_2 = arith.constant 0 : i32
    return %arg0, %c0_i32, %c0_i32_0, %c0_i32_1 : i32, i32, i32, i32
  }
  func.func @transform_1(%arg0: i32) -> i32 {
    %c0_i32 = arith.constant 0 : i32
    %c0_i32_0 = arith.constant 0 : i32
    return %c0_i32 : i32
  }
  func.func @transform_2(%arg0: i32) -> (i32, i32, i32) {
    %c0_i32 = arith.constant 0 : i32
    %c0_i32_0 = arith.constant 0 : i32
    %c0_i32_1 = arith.constant 0 : i32
    return %arg0, %c0_i32, %c0_i32_0 : i32, i32, i32
  }
}

</mosaic_0001>

<llo_original>
// kernel: tpu_custom_call.1
$region0: #{tpu_custom_call.1}
  #allocation0 [shape = 'u32[]', space=smem, size = 0x4, offset = 0x4, fixed_abs, tag = 'smem constant byte address 0x4 - core index']
  #allocation1 [shape = 'u32[144,128]{1,0:T(1,128)}', space=vmem, size = 0x12000, scoped, tag = 'internal scratch']
  #allocation2 [shape = 'f32[2,1,22,22]{3,2,1,0:T(8,128)}', space=vmem, size = 0x6000, scoped, tag = 'scratch operand']
  %s0 = inlined_call_operand.hbm [shape: f32[2,4,16,16], index: 0, kind: input, shape index: {}]
  %s1 = inlined_call_operand.vmem [shape: f32[98], index: 1, kind: input, shape index: {}]
  %s2 = inlined_call_operand.hbm [shape: f32[2,16,16], index: 2, kind: output, shape index: {}]
  %s3 = sld [smem:[#allocation0]]
  $region49: #{tpu_custom_call.1} parent=0
    _
  %s5 = ssub.s32 1, %s3
  %s6 = scalar_select 0, %s5, %s3
  $region1: #{tpu_custom_call.1} parent=0
    #allocation3 [shape = 'u8[65536]{0}', space=vmem, size = 0x10000, scoped, tag = 'input window, operand 0']
    #allocation4 [shape = 's32[2]{0}', space=sflag, size = 0x8, scoped, tag = 'scoped memory for tpu_custom_call.1']
    #allocation5 [shape = 's32[2]{0}', space=sflag, size = 0x8, scoped, tag = 'scoped memory for tpu_custom_call.1']
    #allocation6 [shape = 's32[2]{0}', space=sflag, size = 0x8, scoped, tag = 'scoped memory for tpu_custom_call.1']
    #allocation7 [shape = 'u8[512]{0}', space=smem, size = 0x200, scoped, tag = 'input window, operand 1, single buffered']
    #allocation8 [shape = 'u8[16384]{0}', space=vmem, size = 0x4000, scoped, tag = 'output window, operand 0']
    %7 = vsyncpa [#allocation4], 0
    %s8 = scalar_lea.sflag [#allocation4], 1
    %9 = vsyncpa %s8, 0
    %10 = vsyncpa [#allocation6], 0
    %11 = vsyncpa [#allocation5], 0
    %s12 = scalar_lea.sflag [#allocation5], 1
    %13 = vsyncpa %s12, 0
    loop: start=0, step=1, limit=4
    $region2: #{tpu_custom_call.1} parent=1 // loop_pre_header
      _
    $region3: #{tpu_custom_call.1} parent=1 // loop_header
      %s15 = sphi 0, %s19
      %p16 = scmp.ge.s32.totalorder %s15, 4
      %s25 = sphi 0, %s27
      %s28 = sphi 0, %s25
      %s29 = sphi 0, %s28
      %s45 = sphi 0, %s29
      %s49 = sphi 0, %s49
      %s51 = sphi 0, %s49
      %s52 = sphi 0, %s51
      %s66 = sphi 0, %s52
      %s72 = sphi 0, %s74
      %s75 = sphi 0, %s72
      %s76 = sphi 0, %s75
      %s92 = sphi 0, %s76
    $region4: #{tpu_custom_call.1} parent=1 // loop_header_branch
      %18 = sbr.rel (%p16) target = $region8
    $region5: #{tpu_custom_call.1} parent=1 // loop_body
      %s20 = ssub.s32 %s15, 1
      %s21 = ssub.s32 %s15, 2
      %s22 = sadd.s32 %s15, 1
      %s23 = ssub.s32 %s15, %s22
      %p24 = scmp.eq.s32.totalorder %s23, 0
      %s26 = sadd.s32 %s25, 1
      %s27 = scalar_select %p24, %s25, %s26
      %p30 = pneg %p24
      %p31 = scmp.eq.s32.totalorder %s15, 1
      %p32 = por %p30, %p31
      %p33 = scmp.ne.s32.totalorder %s25, %s28
      %p34 = scmp.eq.s32.totalorder %s15, 0
      %p35 = por %p33, %p34
      %p36 = scmp.ne.s32.totalorder %s25, %s28
      %p37 = scmp.eq.s32.totalorder %s20, 1
      %p38 = por %p36, %p37
      %p39 = scmp.ne.s32.totalorder %s28, %s29
      %p40 = scmp.eq.s32.totalorder %s20, 0
      %p41 = por %p39, %p40
      %p42 = scmp.ne.s32.totalorder %s28, %s29
      %p43 = scmp.eq.s32.totalorder %s21, 1
      %p44 = por %p42, %p43
      %p46 = scmp.ne.s32.totalorder %s29, %s45
      %p47 = scmp.eq.s32.totalorder %s21, 0
      %p48 = por %p46, %p47
      %s50 = sadd.s32 %s49, 1
      %p53 = scmp.eq.s32.totalorder %s15, 1
      %p54 = scmp.ne.s32.totalorder %s49, %s51
      %p55 = scmp.eq.s32.totalorder %s15, 0
      %p56 = por %p54, %p55
      %p57 = scmp.ne.s32.totalorder %s49, %s51
      %p58 = scmp.eq.s32.totalorder %s20, 1
      %p59 = por %p57, %p58
      %p60 = scmp.ne.s32.totalorder %s51, %s52
      %p61 = scmp.eq.s32.totalorder %s20, 0
      %p62 = por %p60, %p61
      %p63 = scmp.ne.s32.totalorder %s51, %s52
      %p64 = scmp.eq.s32.totalorder %s21, 1
      %p65 = por %p63, %p64
      %p67 = scmp.ne.s32.totalorder %s52, %s66
      %p68 = scmp.eq.s32.totalorder %s21, 0
      %p69 = por %p67, %p68
      %s70 = ssub.s32 %s15, %s22
      %p71 = scmp.eq.s32.totalorder %s70, 0
      %s73 = sadd.s32 %s72, 1
      %s74 = scalar_select %p71, %s72, %s73
      %p77 = pneg %p71
      %p78 = scmp.eq.s32.totalorder %s15, 1
      %p79 = por %p77, %p78
      %p80 = scmp.ne.s32.totalorder %s72, %s75
      %p81 = scmp.eq.s32.totalorder %s15, 0
      %p82 = por %p80, %p81
      %p83 = scmp.ne.s32.totalorder %s72, %s75
      %p84 = scmp.eq.s32.totalorder %s20, 1
      %p85 = por %p83, %p84
      %p86 = scmp.ne.s32.totalorder %s75, %s76
      %p87 = scmp.eq.s32.totalorder %s20, 0
      %p88 = por %p86, %p87
      %p89 = scmp.ne.s32.totalorder %s75, %s76
      %p90 = scmp.eq.s32.totalorder %s21, 1
      %p91 = por %p89, %p90
      %p93 = scmp.ne.s32.totalorder %s76, %s92
      %p94 = scmp.eq.s32.totalorder %s21, 0
      %p95 = por %p93, %p94
      %p96 = scmp.le.s32.totalorder 1, %s15
      %p97 = scmp.lt.s32.totalorder %s15, 3
      %p98 = pnand %p96, %p97
      %p99 = pneg %p98
      // Predicated region
      $region9: #{tpu_custom_call.1} parent=5 // pred_check
        _
      $region10: #{tpu_custom_call.1} parent=5 // pred_check_branch
        %101 = sbr.rel (%p98) target = $region12
      $region11: #{tpu_custom_call.1} parent=5 // pred_region
        %s102 = ssub.s32 %s15, 1
        // Predicated region
        $region13: #{tpu_custom_call.1} parent=11 // pred_check
          %p103 = pneg %p62
        $region14: #{tpu_custom_call.1} parent=11 // pred_check_branch
          %105 = sbr.rel (%p103) target = $region16
        $region15: #{tpu_custom_call.1} parent=11 // pred_region
          %s107 = ssub.s32 16, 16
          %108 = vsyncadd [#allocation6], %s107
          %s110 = sshll.u32 %s1, 4
          %s111 = int_to_ptr.vmem [resolvable:$true] %s110
          %113 = dma.vmem_to_smem %s111, 16, [#allocation7], [#allocation6]
        $region16: #{tpu_custom_call.1} parent=11 // pred_fallthru
          _
      $region12: #{tpu_custom_call.1} parent=5 // pred_fallthru
        _
      %p114 = scmp.lt.s32.totalorder %s15, 2
      // Predicated region
      $region17: #{tpu_custom_call.1} parent=5 // pred_check
        %p115 = pneg %p114
      $region18: #{tpu_custom_call.1} parent=5 // pred_check_branch
        %117 = sbr.rel (%p115) target = $region20
      $region19: #{tpu_custom_call.1} parent=5 // pred_region
        // Predicated region
        $region21: #{tpu_custom_call.1} parent=19 // pred_check
          %p118 = pneg %p35
        $region22: #{tpu_custom_call.1} parent=19 // pred_check_branch
          %120 = sbr.rel (%p118) target = $region24
        $region23: #{tpu_custom_call.1} parent=19 // pred_region
          %s121 = sand.u32 %s25, 1
          %s122 = scalar_lea.sflag [#allocation4], %s121
          %s123 = sand.u32 %s25, 1
          %s124 = smul.addr %s123, 64
          %s125 = scalar_lea.vmem [#allocation3], %s124
          %s127 = ssub.s32 1024, 1024
          %128 = vsyncadd %s122, %s127
          %s129 = smul.addr %s15, 8
          %s130 = smul.addr %s129, 128
          %s131 = scalar_lea.hbm %s0, %s130
          %s132 = sshll.u32 %s125, 4
          %s133 = int_to_ptr.vmem [resolvable:$true] %s132
          %138 = dma.hbm_to_vmem [thread:$0]  %s131, 1024, %s133, %s122, 128, 128, 8
        $region24: #{tpu_custom_call.1} parent=19 // pred_fallthru
          _
      $region20: #{tpu_custom_call.1} parent=5 // pred_fallthru
        _
      %p139 = scmp.le.s32.totalorder 1, %s15
      %p140 = scmp.lt.s32.totalorder %s15, 3
      %p141 = pnand %p139, %p140
      %p142 = pneg %p141
      // Predicated region
      $region25: #{tpu_custom_call.1} parent=5 // pred_check
        _
      $region26: #{tpu_custom_call.1} parent=5 // pred_check_branch
        %144 = sbr.rel (%p141) target = $region28
      $region27: #{tpu_custom_call.1} parent=5 // pred_region
        %s145 = ssub.s32 %s15, 1
        %s146 = sand.u32 %s28, 1
        %s147 = scalar_lea.sflag [#allocation4], %s146
        %s148 = sand.u32 %s28, 1
        %s149 = smul.addr %s148, 64
        %s150 = scalar_lea.vmem [#allocation3], %s149
        // Predicated region
        $region29: #{tpu_custom_call.1} parent=27 // pred_check
          %p151 = pneg %p41
        $region30: #{tpu_custom_call.1} parent=27 // pred_check_branch
          %153 = sbr.rel (%p151) target = $region32
        $region31: #{tpu_custom_call.1} parent=27 // pred_region
          %154 = dma.done %s147, 1024
        $region32: #{tpu_custom_call.1} parent=27 // pred_fallthru
          _
        // Predicated region
        $region33: #{tpu_custom_call.1} parent=27 // pred_check
          %p155 = pneg %p62
        $region34: #{tpu_custom_call.1} parent=27 // pred_check_branch
          %157 = sbr.rel (%p155) target = $region36
        $region35: #{tpu_custom_call.1} parent=27 // pred_region
          %158 = dma.done [#allocation6], 16
        $region36: #{tpu_custom_call.1} parent=27 // pred_fallthru
          _
        %159 = sfence
        %s160 = sand.u32 %s28, 1
        %s161 = scalar_lea.sflag [#allocation4], %s160
        %s162 = sand.u32 %s28, 1
        %s163 = smul.addr %s162, 64
        %s164 = scalar_lea.vmem [#allocation3], %s163
        %p165 = pneg %p41
        %p166 = pneg %p38
        %p167 = pneg %p62
        %p168 = pneg %p59
        %p169 = pneg %p88
        %p170 = pneg %p85
        %s171 = sand.u32 %s75, 1
        %s172 = scalar_lea.sflag [#allocation5], %s171
        %s173 = sand.u32 %s75, 1
        %s174 = smul.addr %s173, 16
        %s175 = scalar_lea.vmem [#allocation8], %s174
        %v176 = vld [vmem:[%s150] sm:$0xff]
        %v177 = vld [vmem:[%s150 + $0x8] sm:$0xff]
        %v178 = vld [vmem:[%s150 + $0x10] sm:$0xff]
        %v179 = vld [vmem:[%s150 + $0x18] sm:$0xff]
        %v180 = vld [vmem:[%s150 + $0x20] sm:$0xff]
        %v181 = vld [vmem:[%s150 + $0x28] sm:$0xff]
        %v182 = vld [vmem:[%s150 + $0x30] sm:$0xff]
        %v183 = vld [vmem:[%s150 + $0x38] sm:$0xff]
        %vm184 = vcmask 130048
        %v185 = vsel %vm184, %v176, 0.0
        %v186 = vsel %vm184, %v178, 0.0
        %v187 = vadd.f32 %v185, %v186
        %v188 = vsel %vm184, %v180, 0.0
        %v189 = vadd.f32 %v187, %v188
        %v190 = vsel %vm184, %v182, 0.0
        %v191 = vadd.f32 %v189, %v190
        %v192 = vsel %vm184, %v177, 0.0
        %v193 = vsel %vm184, %v179, 0.0
        %v194 = vadd.f32 %v192, %v193
        %v195 = vsel %vm184, %v181, 0.0
        %v196 = vadd.f32 %v194, %v195
        %v197 = vsel %vm184, %v183, 0.0
        %v198 = vadd.f32 %v196, %v197
        %v199 = vsel %vm184, %v176, -inf
        %v200 = vsel %vm184, %v178, -inf
        %v201 = vsel %vm184, %v180, -inf
        %v202 = vmax.f32 %v199, %v201
        %v203 = vsel %vm184, %v182, -inf
        %v204 = vmax.f32 %v200, %v203
        %v205 = vmax.f32 %v202, %v204
        %v206 = vsel %vm184, %v177, -inf
        %v207 = vsel %vm184, %v179, -inf
        %v208 = vsel %vm184, %v181, -inf
        %v209 = vmax.f32 %v206, %v208
        %v210 = vsel %vm184, %v183, -inf
        %v211 = vmax.f32 %v207, %v210
        %v212 = vmax.f32 %v209, %v211
        %vm213 = vcmask 179200
        %214 = vst.msk [vmem:[#allocation2] sm:$0xff] %vm213, 0.0
        %215 = vst.msk [vmem:[#allocation2 + $0x8] sm:$0xff] %vm213, 0.0
        %vm216 = vcmask 177152
        %217 = vst.msk [vmem:[#allocation2 + $0x10] sm:$0x3f] %vm216, 0.0
        %218 = vst.msk [vmem:[#allocation2 + $0x18] sm:$0xff] %vm213, 0.0
        %219 = vst.msk [vmem:[#allocation2 + $0x20] sm:$0xff] %vm213, 0.0
        %220 = vst.msk [vmem:[#allocation2 + $0x28] sm:$0x3f] %vm216, 0.0
        %223 = vrot.lane.b32.xlu0 %v191, 3
        %v224 = vpop.permute.xlu0 %223
        %225 = vrot.lane.b32.xlu0 %v198, 3
        %v226 = vpop.permute.xlu0 %225
        %vm229 = vcmask 154648
        %230 = vst.msk [vmem:[#allocation2 + $0x3] sm:$0xff] %vm229, %v224
        %231 = vst.msk [vmem:[#allocation2 + $0xb] sm:$0xff] %vm229, %v226
        %234 = vrot.lane.b32.xlu0 %v205, 3
        %v235 = vpop.permute.xlu0 %234
        %236 = vrot.lane.b32.xlu0 %v212, 3
        %v237 = vpop.permute.xlu0 %236
        %s240 = scalar_lea.vmem [#allocation2], 24
        %241 = vst.msk [vmem:[%s240 + $0x3] sm:$0xff] %vm229, %v235
        %242 = vst.msk [vmem:[%s240 + $0xb] sm:$0xff] %vm229, %v237
        %v243 = vld [vmem:[#allocation2] sm:$0xff]
        %v244 = vld [vmem:[#allocation2 + $0x8] sm:$0xff]
        %v245 = vld [vmem:[#allocation2 + $0x10] sm:$0x3f]
        %s246 = sld [smem:[#allocation7]]
        %v247 = vstv %s246
        %v248 = vmul.f32 %v247, %v243
        %v249 = vmul.f32 %v247, %v244
        %v250 = vadd.f32 %v248, 0.0
        %v251 = vadd.f32 %v249, 0.0
        %s252 = sld [smem:[#allocation7 + $0x7]]
        %v253 = vstv %s252
        %v254 = vmul.f32 %v253, %v243
        %v255 = vmul.f32 %v253, %v244
        %v256 = vmul.f32 %v253, %v245
        %vm260 = vcmask 1046528
        %v261 = vrot.slane %v254, 1
        %v262 = vrot.slane %v255, 1
        %v263 = vsel %vm260, %v261, %v262
        %v264 = vrot.slane %v256, 1
        %v265 = vsel %vm260, %v262, %v264
        %v268 = vadd.f32 %v250, %v263
        %v269 = vadd.f32 %v251, %v265
        %s270 = sld [smem:[#allocation7 + $0xe]]
        %v271 = vstv %s270
        %v272 = vmul.f32 %v271, %v243
        %v273 = vmul.f32 %v271, %v244
        %v274 = vmul.f32 %v271, %v245
        %vm278 = vcmask 1045504
        %v279 = vrot.slane %v272, 2
        %v280 = vrot.slane %v273, 2
        %v281 = vsel %vm278, %v279, %v280
        %v282 = vrot.slane %v274, 2
        %v283 = vsel %vm278, %v280, %v282
        %v286 = vadd.f32 %v268, %v281
        %v287 = vadd.f32 %v269, %v283
        %s288 = sld [smem:[#allocation7 + $0x15]]
        %v289 = vstv %s288
        %v290 = vmul.f32 %v289, %v243
        %v291 = vmul.f32 %v289, %v244
        %v292 = vmul.f32 %v289, %v245
        %vm296 = vcmask 1044480
        %v297 = vrot.slane %v290, 3
        %v298 = vrot.slane %v291, 3
        %v299 = vsel %vm296, %v297, %v298
        %v300 = vrot.slane %v292, 3
        %v301 = vsel %vm296, %v298, %v300
        %v304 = vadd.f32 %v286, %v299
        %v305 = vadd.f32 %v287, %v301
        %s306 = sld [smem:[#allocation7 + $0x1c]]
        %v307 = vstv %s306
        %v308 = vmul.f32 %v307, %v243
        %v309 = vmul.f32 %v307, %v244
        %v310 = vmul.f32 %v307, %v245
        %vm314 = vcmask 1043456
        %v315 = vrot.slane %v308, 4
        %v316 = vrot.slane %v309, 4
        %v317 = vsel %vm314, %v315, %v316
        %v318 = vrot.slane %v310, 4
        %v319 = vsel %vm314, %v316, %v318
        %v322 = vadd.f32 %v304, %v317
        %v323 = vadd.f32 %v305, %v319
        %s324 = sld [smem:[#allocation7 + $0x23]]
        %v325 = vstv %s324
        %v326 = vmul.f32 %v325, %v243
        %v327 = vmul.f32 %v325, %v244
        %v328 = vmul.f32 %v325, %v245
        %vm332 = vcmask 1042432
        %v333 = vrot.slane %v326, 5
        %v334 = vrot.slane %v327, 5
        %v335 = vsel %vm332, %v333, %v334
        %v336 = vrot.slane %v328, 5
        %v337 = vsel %vm332, %v334, %v336
        %v340 = vadd.f32 %v322, %v335
        %v341 = vadd.f32 %v323, %v337
        %s342 = sld [smem:[#allocation7 + $0x2a]]
        %v343 = vstv %s342
        %v344 = vmul.f32 %v343, %v243
        %v345 = vmul.f32 %v343, %v244
        %v346 = vmul.f32 %v343, %v245
        %vm350 = vcmask 1041408
        %v351 = vrot.slane %v344, 6
        %v352 = vrot.slane %v345, 6
        %v353 = vsel %vm350, %v351, %v352
        %v354 = vrot.slane %v346, 6
        %v355 = vsel %vm350, %v352, %v354
        %v358 = vadd.f32 %v340, %v353
        %v359 = vadd.f32 %v341, %v355
        %v360 = vld [vmem:[%s240] sm:$0xff]
        %v361 = vld [vmem:[%s240 + $0x8] sm:$0xff]
        %v362 = vld [vmem:[%s240 + $0x10] sm:$0x3f]
        %s363 = sld [smem:[#allocation7 + $0x31]]
        %v364 = vstv %s363
        %v365 = vmul.f32 %v364, %v360
        %v366 = vmul.f32 %v364, %v361
        %v367 = vadd.f32 %v358, %v365
        %v368 = vadd.f32 %v359, %v366
        %s369 = sld [smem:[#allocation7 + $0x38]]
        %v370 = vstv %s369
        %v371 = vmul.f32 %v370, %v360
        %v372 = vmul.f32 %v370, %v361
        %v373 = vmul.f32 %v370, %v362
        %v377 = vrot.slane %v371, 1
        %v378 = vrot.slane %v372, 1
        %v379 = vsel %vm260, %v377, %v378
        %v380 = vrot.slane %v373, 1
        %v381 = vsel %vm260, %v378, %v380
        %v384 = vadd.f32 %v367, %v379
        %v385 = vadd.f32 %v368, %v381
        %s386 = sld [smem:[#allocation7 + $0x3f]]
        %v387 = vstv %s386
        %v388 = vmul.f32 %v387, %v360
        %v389 = vmul.f32 %v387, %v361
        %v390 = vmul.f32 %v387, %v362
        %v394 = vrot.slane %v388, 2
        %v395 = vrot.slane %v389, 2
        %v396 = vsel %vm278, %v394, %v395
        %v397 = vrot.slane %v390, 2
        %v398 = vsel %vm278, %v395, %v397
        %v401 = vadd.f32 %v384, %v396
        %v402 = vadd.f32 %v385, %v398
        %s403 = sld [smem:[#allocation7 + $0x46]]
        %v404 = vstv %s403
        %v405 = vmul.f32 %v404, %v360
        %v406 = vmul.f32 %v404, %v361
        %v407 = vmul.f32 %v404, %v362
        %v411 = vrot.slane %v405, 3
        %v412 = vrot.slane %v406, 3
        %v413 = vsel %vm296, %v411, %v412
        %v414 = vrot.slane %v407, 3
        %v415 = vsel %vm296, %v412, %v414
        %v418 = vadd.f32 %v401, %v413
        %v419 = vadd.f32 %v402, %v415
        %s420 = sld [smem:[#allocation7 + $0x4d]]
        %v421 = vstv %s420
        %v422 = vmul.f32 %v421, %v360
        %v423 = vmul.f32 %v421, %v361
        %v424 = vmul.f32 %v421, %v362
        %v428 = vrot.slane %v422, 4
        %v429 = vrot.slane %v423, 4
        %v430 = vsel %vm314, %v428, %v429
        %v431 = vrot.slane %v424, 4
        %v432 = vsel %vm314, %v429, %v431
        %v435 = vadd.f32 %v418, %v430
        %v436 = vadd.f32 %v419, %v432
        %s437 = sld [smem:[#allocation7 + $0x54]]
        %v438 = vstv %s437
        %v439 = vmul.f32 %v438, %v360
        %v440 = vmul.f32 %v438, %v361
        %v441 = vmul.f32 %v438, %v362
        %v445 = vrot.slane %v439, 5
        %v446 = vrot.slane %v440, 5
        %v447 = vsel %vm332, %v445, %v446
        %v448 = vrot.slane %v441, 5
        %v449 = vsel %vm332, %v446, %v448
        %v452 = vadd.f32 %v435, %v447
        %v453 = vadd.f32 %v436, %v449
        %s454 = sld [smem:[#allocation7 + $0x5b]]
        %v455 = vstv %s454
        %v456 = vmul.f32 %v455, %v360
        %v457 = vmul.f32 %v455, %v361
        %v458 = vmul.f32 %v455, %v362
        %v462 = vrot.slane %v456, 6
        %v463 = vrot.slane %v457, 6
        %v464 = vsel %vm350, %v462, %v463
        %v465 = vrot.slane %v458, 6
        %v466 = vsel %vm350, %v463, %v465
        %v469 = vadd.f32 %v452, %v464
        %v470 = vadd.f32 %v453, %v466
        %s471 = sld [smem:[#allocation7 + $0x1]]
        %v472 = vstv %s471
        %v473 = vmul.f32 %v472, %v243
        %v474 = vmul.f32 %v472, %v244
        %477 = vrot.lane.b32.xlu0 %v473, 127
        %v478 = vpop.permute.xlu0 %477
        %479 = vrot.lane.b32.xlu0 %v474, 127
        %v480 = vpop.permute.xlu0 %479
        %v483 = vadd.f32 %v469, %v478
        %v484 = vadd.f32 %v470, %v480
        %s485 = sld [smem:[#allocation7 + $0x8]]
        %v486 = vstv %s485
        %v487 = vmul.f32 %v486, %v243
        %v488 = vmul.f32 %v486, %v244
        %v489 = vmul.f32 %v486, %v245
        %v493 = vrot.slane %v487, 1
        %v494 = vrot.slane %v488, 1
        %v495 = vsel %vm260, %v493, %v494
        %v496 = vrot.slane %v489, 1
        %v497 = vsel %vm260, %v494, %v496
        %498 = vrot.lane.b32.xlu0 %v495, 127
        %v499 = vpop.permute.xlu0 %498
        %500 = vrot.lane.b32.xlu0 %v497, 127
        %v501 = vpop.permute.xlu0 %500
        %v504 = vadd.f32 %v483, %v499
        %v505 = vadd.f32 %v484, %v501
        %s506 = sld [smem:[#allocation7 + $0xf]]
        %v507 = vstv %s506
        %v508 = vmul.f32 %v507, %v243
        %v509 = vmul.f32 %v507, %v244
        %v510 = vmul.f32 %v507, %v245
        %v514 = vrot.slane %v508, 2
        %v515 = vrot.slane %v509, 2
        %v516 = vsel %vm278, %v514, %v515
        %v517 = vrot.slane %v510, 2
        %v518 = vsel %vm278, %v515, %v517
        %519 = vrot.lane.b32.xlu0 %v516, 127
        %v520 = vpop.permute.xlu0 %519
        %521 = vrot.lane.b32.xlu0 %v518, 127
        %v522 = vpop.permute.xlu0 %521
        %v525 = vadd.f32 %v504, %v520
        %v526 = vadd.f32 %v505, %v522
        %s527 = sld [smem:[#allocation7 + $0x16]]
        %v528 = vstv %s527
        %v529 = vmul.f32 %v528, %v243
        %v530 = vmul.f32 %v528, %v244
        %v531 = vmul.f32 %v528, %v245
        %v535 = vrot.slane %v529, 3
        %v536 = vrot.slane %v530, 3
        %v537 = vsel %vm296, %v535, %v536
        %v538 = vrot.slane %v531, 3
        %v539 = vsel %vm296, %v536, %v538
        %540 = vrot.lane.b32.xlu0 %v537, 127
        %v541 = vpop.permute.xlu0 %540
        %542 = vrot.lane.b32.xlu0 %v539, 127
        %v543 = vpop.permute.xlu0 %542
        %v546 = vadd.f32 %v525, %v541
        %v547 = vadd.f32 %v526, %v543
        %s548 = sld [smem:[#allocation7 + $0x1d]]
        %v549 = vstv %s548
        %v550 = vmul.f32 %v549, %v243
        %v551 = vmul.f32 %v549, %v244
        %v552 = vmul.f32 %v549, %v245
        %v556 = vrot.slane %v550, 4
        %v557 = vrot.slane %v551, 4
        %v558 = vsel %vm314, %v556, %v557
        %v559 = vrot.slane %v552, 4
        %v560 = vsel %vm314, %v557, %v559
        %561 = vrot.lane.b32.xlu0 %v558, 127
        %v562 = vpop.permute.xlu0 %561
        %563 = vrot.lane.b32.xlu0 %v560, 127
        %v564 = vpop.permute.xlu0 %563
        %v567 = vadd.f32 %v546, %v562
        %v568 = vadd.f32 %v547, %v564
        %s569 = sld [smem:[#allocation7 + $0x24]]
        %v570 = vstv %s569
        %v571 = vmul.f32 %v570, %v243
        %v572 = vmul.f32 %v570, %v244
        %v573 = vmul.f32 %v570, %v245
        %v577 = vrot.slane %v571, 5
        %v578 = vrot.slane %v572, 5
        %v579 = vsel %vm332, %v577, %v578
        %v580 = vrot.slane %v573, 5
        %v581 = vsel %vm332, %v578, %v580
        %582 = vrot.lane.b32.xlu0 %v579, 127
        %v583 = vpop.permute.xlu0 %582
        %584 = vrot.lane.b32.xlu0 %v581, 127
        %v585 = vpop.permute.xlu0 %584
        %v588 = vadd.f32 %v567, %v583
        %v589 = vadd.f32 %v568, %v585
        %s590 = sld [smem:[#allocation7 + $0x2b]]
        %v591 = vstv %s590
        %v592 = vmul.f32 %v591, %v243
        %v593 = vmul.f32 %v591, %v244
        %v594 = vmul.f32 %v591, %v245
        %v598 = vrot.slane %v592, 6
        %v599 = vrot.slane %v593, 6
        %v600 = vsel %vm350, %v598, %v599
        %v601 = vrot.slane %v594, 6
        %v602 = vsel %vm350, %v599, %v601
        %603 = vrot.lane.b32.xlu0 %v600, 127
        %v604 = vpop.permute.xlu0 %603
        %605 = vrot.lane.b32.xlu0 %v602, 127
        %v606 = vpop.permute.xlu0 %605
        %v609 = vadd.f32 %v588, %v604
        %v610 = vadd.f32 %v589, %v606
        %s611 = sld [smem:[#allocation7 + $0x32]]
        %v612 = vstv %s611
        %v613 = vmul.f32 %v612, %v360
        %v614 = vmul.f32 %v612, %v361
        %617 = vrot.lane.b32.xlu0 %v613, 127
        %v618 = vpop.permute.xlu0 %617
        %619 = vrot.lane.b32.xlu0 %v614, 127
        %v620 = vpop.permute.xlu0 %619
        %v623 = vadd.f32 %v609, %v618
        %v624 = vadd.f32 %v610, %v620
        %s625 = sld [smem:[#allocation7 + $0x39]]
        %v626 = vstv %s625
        %v627 = vmul.f32 %v626, %v360
        %v628 = vmul.f32 %v626, %v361
        %v629 = vmul.f32 %v626, %v362
        %v633 = vrot.slane %v627, 1
        %v634 = vrot.slane %v628, 1
        %v635 = vsel %vm260, %v633, %v634
        %v636 = vrot.slane %v629, 1
        %v637 = vsel %vm260, %v634, %v636
        %638 = vrot.lane.b32.xlu0 %v635, 127
        %v639 = vpop.permute.xlu0 %638
        %640 = vrot.lane.b32.xlu0 %v637, 127
        %v641 = vpop.permute.xlu0 %640
        %v644 = vadd.f32 %v623, %v639
        %v645 = vadd.f32 %v624, %v641
        %s646 = sld [smem:[#allocation7 + $0x40]]
        %v647 = vstv %s646
        %v648 = vmul.f32 %v647, %v360
        %v649 = vmul.f32 %v647, %v361
        %v650 = vmul.f32 %v647, %v362
        %v654 = vrot.slane %v648, 2
        %v655 = vrot.slane %v649, 2
        %v656 = vsel %vm278, %v654, %v655
        %v657 = vrot.slane %v650, 2
        %v658 = vsel %vm278, %v655, %v657
        %659 = vrot.lane.b32.xlu0 %v656, 127
        %v660 = vpop.permute.xlu0 %659
        %661 = vrot.lane.b32.xlu0 %v658, 127
        %v662 = vpop.permute.xlu0 %661
        %v665 = vadd.f32 %v644, %v660
        %v666 = vadd.f32 %v645, %v662
        %s667 = sld [smem:[#allocation7 + $0x47]]
        %v668 = vstv %s667
        %v669 = vmul.f32 %v668, %v360
        %v670 = vmul.f32 %v668, %v361
        %v671 = vmul.f32 %v668, %v362
        %v675 = vrot.slane %v669, 3
        %v676 = vrot.slane %v670, 3
        %v677 = vsel %vm296, %v675, %v676
        %v678 = vrot.slane %v671, 3
        %v679 = vsel %vm296, %v676, %v678
        %680 = vrot.lane.b32.xlu0 %v677, 127
        %v681 = vpop.permute.xlu0 %680
        %682 = vrot.lane.b32.xlu0 %v679, 127
        %v683 = vpop.permute.xlu0 %682
        %v686 = vadd.f32 %v665, %v681
        %v687 = vadd.f32 %v666, %v683
        %s688 = sld [smem:[#allocation7 + $0x4e]]
        %v689 = vstv %s688
        %v690 = vmul.f32 %v689, %v360
        %v691 = vmul.f32 %v689, %v361
        %v692 = vmul.f32 %v689, %v362
        %v696 = vrot.slane %v690, 4
        %v697 = vrot.slane %v691, 4
        %v698 = vsel %vm314, %v696, %v697
        %v699 = vrot.slane %v692, 4
        %v700 = vsel %vm314, %v697, %v699
        %701 = vrot.lane.b32.xlu0 %v698, 127
        %v702 = vpop.permute.xlu0 %701
        %703 = vrot.lane.b32.xlu0 %v700, 127
        %v704 = vpop.permute.xlu0 %703
        %v707 = vadd.f32 %v686, %v702
        %v708 = vadd.f32 %v687, %v704
        %s709 = sld [smem:[#allocation7 + $0x55]]
        %v710 = vstv %s709
        %v711 = vmul.f32 %v710, %v360
        %v712 = vmul.f32 %v710, %v361
        %v713 = vmul.f32 %v710, %v362
        %v717 = vrot.slane %v711, 5
        %v718 = vrot.slane %v712, 5
        %v719 = vsel %vm332, %v717, %v718
        %v720 = vrot.slane %v713, 5
        %v721 = vsel %vm332, %v718, %v720
        %722 = vrot.lane.b32.xlu0 %v719, 127
        %v723 = vpop.permute.xlu0 %722
        %724 = vrot.lane.b32.xlu0 %v721, 127
        %v725 = vpop.permute.xlu0 %724
        %v728 = vadd.f32 %v707, %v723
        %v729 = vadd.f32 %v708, %v725
        %s730 = sld [smem:[#allocation7 + $0x5c]]
        %v731 = vstv %s730
        %v732 = vmul.f32 %v731, %v360
        %v733 = vmul.f32 %v731, %v361
        %v734 = vmul.f32 %v731, %v362
        %v738 = vrot.slane %v732, 6
        %v739 = vrot.slane %v733, 6
        %v740 = vsel %vm350, %v738, %v739
        %v741 = vrot.slane %v734, 6
        %v742 = vsel %vm350, %v739, %v741
        %743 = vrot.lane.b32.xlu0 %v740, 127
        %v744 = vpop.permute.xlu0 %743
        %745 = vrot.lane.b32.xlu0 %v742, 127
        %v746 = vpop.permute.xlu0 %745
        %v749 = vadd.f32 %v728, %v744
        %v750 = vadd.f32 %v729, %v746
        %s751 = sld [smem:[#allocation7 + $0x2]]
        %v752 = vstv %s751
        %v753 = vmul.f32 %v752, %v243
        %v754 = vmul.f32 %v752, %v244
        %757 = vrot.lane.b32.xlu0 %v753, 126
        %v758 = vpop.permute.xlu0 %757
        %759 = vrot.lane.b32.xlu0 %v754, 126
        %v760 = vpop.permute.xlu0 %759
        %v763 = vadd.f32 %v749, %v758
        %v764 = vadd.f32 %v750, %v760
        %s765 = sld [smem:[#allocation7 + $0x9]]
        %v766 = vstv %s765
        %v767 = vmul.f32 %v766, %v243
        %v768 = vmul.f32 %v766, %v244
        %v769 = vmul.f32 %v766, %v245
        %v773 = vrot.slane %v767, 1
        %v774 = vrot.slane %v768, 1
        %v775 = vsel %vm260, %v773, %v774
        %v776 = vrot.slane %v769, 1
        %v777 = vsel %vm260, %v774, %v776
        %778 = vrot.lane.b32.xlu0 %v775, 126
        %v779 = vpop.permute.xlu0 %778
        %780 = vrot.lane.b32.xlu0 %v777, 126
        %v781 = vpop.permute.xlu0 %780
        %v784 = vadd.f32 %v763, %v779
        %v785 = vadd.f32 %v764, %v781
        %s786 = sld [smem:[#allocation7 + $0x10]]
        %v787 = vstv %s786
        %v788 = vmul.f32 %v787, %v243
        %v789 = vmul.f32 %v787, %v244
        %v790 = vmul.f32 %v787, %v245
        %v794 = vrot.slane %v788, 2
        %v795 = vrot.slane %v789, 2
        %v796 = vsel %vm278, %v794, %v795
        %v797 = vrot.slane %v790, 2
        %v798 = vsel %vm278, %v795, %v797
        %799 = vrot.lane.b32.xlu0 %v796, 126
        %v800 = vpop.permute.xlu0 %799
        %801 = vrot.lane.b32.xlu0 %v798, 126
        %v802 = vpop.permute.xlu0 %801
        %v805 = vadd.f32 %v784, %v800
        %v806 = vadd.f32 %v785, %v802
        %s807 = sld [smem:[#allocation7 + $0x17]]
        %v808 = vstv %s807
        %v809 = vmul.f32 %v808, %v243
        %v810 = vmul.f32 %v808, %v244
        %v811 = vmul.f32 %v808, %v245
        %v815 = vrot.slane %v809, 3
        %v816 = vrot.slane %v810, 3
        %v817 = vsel %vm296, %v815, %v816
        %v818 = vrot.slane %v811, 3
        %v819 = vsel %vm296, %v816, %v818
        %820 = vrot.lane.b32.xlu0 %v817, 126
        %v821 = vpop.permute.xlu0 %820
        %822 = vrot.lane.b32.xlu0 %v819, 126
        %v823 = vpop.permute.xlu0 %822
        %v826 = vadd.f32 %v805, %v821
        %v827 = vadd.f32 %v806, %v823
        %s828 = sld [smem:[#allocation7 + $0x1e]]
        %v829 = vstv %s828
        %v830 = vmul.f32 %v829, %v243
        %v831 = vmul.f32 %v829, %v244
        %v832 = vmul.f32 %v829, %v245
        %v836 = vrot.slane %v830, 4
        %v837 = vrot.slane %v831, 4
        %v838 = vsel %vm314, %v836, %v837
        %v839 = vrot.slane %v832, 4
        %v840 = vsel %vm314, %v837, %v839
        %841 = vrot.lane.b32.xlu0 %v838, 126
        %v842 = vpop.permute.xlu0 %841
        %843 = vrot.lane.b32.xlu0 %v840, 126
        %v844 = vpop.permute.xlu0 %843
        %v847 = vadd.f32 %v826, %v842
        %v848 = vadd.f32 %v827, %v844
        %s849 = sld [smem:[#allocation7 + $0x25]]
        %v850 = vstv %s849
        %v851 = vmul.f32 %v850, %v243
        %v852 = vmul.f32 %v850, %v244
        %v853 = vmul.f32 %v850, %v245
        %v857 = vrot.slane %v851, 5
        %v858 = vrot.slane %v852, 5
        %v859 = vsel %vm332, %v857, %v858
        %v860 = vrot.slane %v853, 5
        %v861 = vsel %vm332, %v858, %v860
        %862 = vrot.lane.b32.xlu0 %v859, 126
        %v863 = vpop.permute.xlu0 %862
        %864 = vrot.lane.b32.xlu0 %v861, 126
        %v865 = vpop.permute.xlu0 %864
        %v868 = vadd.f32 %v847, %v863
        %v869 = vadd.f32 %v848, %v865
        %s870 = sld [smem:[#allocation7 + $0x2c]]
        %v871 = vstv %s870
        %v872 = vmul.f32 %v871, %v243
        %v873 = vmul.f32 %v871, %v244
        %v874 = vmul.f32 %v871, %v245
        %v878 = vrot.slane %v872, 6
        %v879 = vrot.slane %v873, 6
        %v880 = vsel %vm350, %v878, %v879
        %v881 = vrot.slane %v874, 6
        %v882 = vsel %vm350, %v879, %v881
        %883 = vrot.lane.b32.xlu0 %v880, 126
        %v884 = vpop.permute.xlu0 %883
        %885 = vrot.lane.b32.xlu0 %v882, 126
        %v886 = vpop.permute.xlu0 %885
        %v889 = vadd.f32 %v868, %v884
        %v890 = vadd.f32 %v869, %v886
        %s891 = sld [smem:[#allocation7 + $0x33]]
        %v892 = vstv %s891
        %v893 = vmul.f32 %v892, %v360
        %v894 = vmul.f32 %v892, %v361
        %897 = vrot.lane.b32.xlu0 %v893, 126
        %v898 = vpop.permute.xlu0 %897
        %899 = vrot.lane.b32.xlu0 %v894, 126
        %v900 = vpop.permute.xlu0 %899
        %v903 = vadd.f32 %v889, %v898
        %v904 = vadd.f32 %v890, %v900
        %s905 = sld [smem:[#allocation7 + $0x3a]]
        %v906 = vstv %s905
        %v907 = vmul.f32 %v906, %v360
        %v908 = vmul.f32 %v906, %v361
        %v909 = vmul.f32 %v906, %v362
        %v913 = vrot.slane %v907, 1
        %v914 = vrot.slane %v908, 1
        %v915 = vsel %vm260, %v913, %v914
        %v916 = vrot.slane %v909, 1
        %v917 = vsel %vm260, %v914, %v916
        %918 = vrot.lane.b32.xlu0 %v915, 126
        %v919 = vpop.permute.xlu0 %918
        %920 = vrot.lane.b32.xlu0 %v917, 126
        %v921 = vpop.permute.xlu0 %920
        %v924 = vadd.f32 %v903, %v919
        %v925 = vadd.f32 %v904, %v921
        %s926 = sld [smem:[#allocation7 + $0x41]]
        %v927 = vstv %s926
        %v928 = vmul.f32 %v927, %v360
        %v929 = vmul.f32 %v927, %v361
        %v930 = vmul.f32 %v927, %v362
        %v934 = vrot.slane %v928, 2
        %v935 = vrot.slane %v929, 2
        %v936 = vsel %vm278, %v934, %v935
        %v937 = vrot.slane %v930, 2
        %v938 = vsel %vm278, %v935, %v937
        %939 = vrot.lane.b32.xlu0 %v936, 126
        %v940 = vpop.permute.xlu0 %939
        %941 = vrot.lane.b32.xlu0 %v938, 126
        %v942 = vpop.permute.xlu0 %941
        %v945 = vadd.f32 %v924, %v940
        %v946 = vadd.f32 %v925, %v942
        %s947 = sld [smem:[#allocation7 + $0x48]]
        %v948 = vstv %s947
        %v949 = vmul.f32 %v948, %v360
        %v950 = vmul.f32 %v948, %v361
        %v951 = vmul.f32 %v948, %v362
        %v955 = vrot.slane %v949, 3
        %v956 = vrot.slane %v950, 3
        %v957 = vsel %vm296, %v955, %v956
        %v958 = vrot.slane %v951, 3
        %v959 = vsel %vm296, %v956, %v958
        %960 = vrot.lane.b32.xlu0 %v957, 126
        %v961 = vpop.permute.xlu0 %960
        %962 = vrot.lane.b32.xlu0 %v959, 126
        %v963 = vpop.permute.xlu0 %962
        %v966 = vadd.f32 %v945, %v961
        %v967 = vadd.f32 %v946, %v963
        %s968 = sld [smem:[#allocation7 + $0x4f]]
        %v969 = vstv %s968
        %v970 = vmul.f32 %v969, %v360
        %v971 = vmul.f32 %v969, %v361
        %v972 = vmul.f32 %v969, %v362
        %v976 = vrot.slane %v970, 4
        %v977 = vrot.slane %v971, 4
        %v978 = vsel %vm314, %v976, %v977
        %v979 = vrot.slane %v972, 4
        %v980 = vsel %vm314, %v977, %v979
        %981 = vrot.lane.b32.xlu0 %v978, 126
        %v982 = vpop.permute.xlu0 %981
        %983 = vrot.lane.b32.xlu0 %v980, 126
        %v984 = vpop.permute.xlu0 %983
        %v987 = vadd.f32 %v966, %v982
        %v988 = vadd.f32 %v967, %v984
        %s989 = sld [smem:[#allocation7 + $0x56]]
        %v990 = vstv %s989
        %v991 = vmul.f32 %v990, %v360
        %v992 = vmul.f32 %v990, %v361
        %v993 = vmul.f32 %v990, %v362
        %v997 = vrot.slane %v991, 5
        %v998 = vrot.slane %v992, 5
        %v999 = vsel %vm332, %v997, %v998
        %v1000 = vrot.slane %v993, 5
        %v1001 = vsel %vm332, %v998, %v1000
        %1002 = vrot.lane.b32.xlu0 %v999, 126
        %v1003 = vpop.permute.xlu0 %1002
        %1004 = vrot.lane.b32.xlu0 %v1001, 126
        %v1005 = vpop.permute.xlu0 %1004
        %v1008 = vadd.f32 %v987, %v1003
        %v1009 = vadd.f32 %v988, %v1005
        %s1010 = sld [smem:[#allocation7 + $0x5d]]
        %v1011 = vstv %s1010
        %v1012 = vmul.f32 %v1011, %v360
        %v1013 = vmul.f32 %v1011, %v361
        %v1014 = vmul.f32 %v1011, %v362
        %v1018 = vrot.slane %v1012, 6
        %v1019 = vrot.slane %v1013, 6
        %v1020 = vsel %vm350, %v1018, %v1019
        %v1021 = vrot.slane %v1014, 6
        %v1022 = vsel %vm350, %v1019, %v1021
        %1023 = vrot.lane.b32.xlu0 %v1020, 126
        %v1024 = vpop.permute.xlu0 %1023
        %1025 = vrot.lane.b32.xlu0 %v1022, 126
        %v1026 = vpop.permute.xlu0 %1025
        %v1029 = vadd.f32 %v1008, %v1024
        %v1030 = vadd.f32 %v1009, %v1026
        %s1031 = sld [smem:[#allocation7 + $0x3]]
        %v1032 = vstv %s1031
        %v1033 = vmul.f32 %v1032, %v243
        %v1034 = vmul.f32 %v1032, %v244
        %1037 = vrot.lane.b32.xlu0 %v1033, 125
        %v1038 = vpop.permute.xlu0 %1037
        %1039 = vrot.lane.b32.xlu0 %v1034, 125
        %v1040 = vpop.permute.xlu0 %1039
        %v1043 = vadd.f32 %v1029, %v1038
        %v1044 = vadd.f32 %v1030, %v1040
        %s1045 = sld [smem:[#allocation7 + $0xa]]
        %v1046 = vstv %s1045
        %v1047 = vmul.f32 %v1046, %v243
        %v1048 = vmul.f32 %v1046, %v244
        %v1049 = vmul.f32 %v1046, %v245
        %v1053 = vrot.slane %v1047, 1
        %v1054 = vrot.slane %v1048, 1
        %v1055 = vsel %vm260, %v1053, %v1054
        %v1056 = vrot.slane %v1049, 1
        %v1057 = vsel %vm260, %v1054, %v1056
        %1058 = vrot.lane.b32.xlu0 %v1055, 125
        %v1059 = vpop.permute.xlu0 %1058
        %1060 = vrot.lane.b32.xlu0 %v1057, 125
        %v1061 = vpop.permute.xlu0 %1060
        %v1064 = vadd.f32 %v1043, %v1059
        %v1065 = vadd.f32 %v1044, %v1061
        %s1066 = sld [smem:[#allocation7 + $0x11]]
        %v1067 = vstv %s1066
        %v1068 = vmul.f32 %v1067, %v243
        %v1069 = vmul.f32 %v1067, %v244
        %v1070 = vmul.f32 %v1067, %v245
        %v1074 = vrot.slane %v1068, 2
        %v1075 = vrot.slane %v1069, 2
        %v1076 = vsel %vm278, %v1074, %v1075
        %v1077 = vrot.slane %v1070, 2
        %v1078 = vsel %vm278, %v1075, %v1077
        %1079 = vrot.lane.b32.xlu0 %v1076, 125
        %v1080 = vpop.permute.xlu0 %1079
        %1081 = vrot.lane.b32.xlu0 %v1078, 125
        %v1082 = vpop.permute.xlu0 %1081
        %v1085 = vadd.f32 %v1064, %v1080
        %v1086 = vadd.f32 %v1065, %v1082
        %s1087 = sld [smem:[#allocation7 + $0x18]]
        %v1088 = vstv %s1087
        %v1089 = vmul.f32 %v1088, %v243
        %v1090 = vmul.f32 %v1088, %v244
        %v1091 = vmul.f32 %v1088, %v245
        %v1095 = vrot.slane %v1089, 3
        %v1096 = vrot.slane %v1090, 3
        %v1097 = vsel %vm296, %v1095, %v1096
        %v1098 = vrot.slane %v1091, 3
        %v1099 = vsel %vm296, %v1096, %v1098
        %1100 = vrot.lane.b32.xlu0 %v1097, 125
        %v1101 = vpop.permute.xlu0 %1100
        %1102 = vrot.lane.b32.xlu0 %v1099, 125
        %v1103 = vpop.permute.xlu0 %1102
        %v1106 = vadd.f32 %v1085, %v1101
        %v1107 = vadd.f32 %v1086, %v1103
        %s1108 = sld [smem:[#allocation7 + $0x1f]]
        %v1109 = vstv %s1108
        %v1110 = vmul.f32 %v1109, %v243
        %v1111 = vmul.f32 %v1109, %v244
        %v1112 = vmul.f32 %v1109, %v245
        %v1116 = vrot.slane %v1110, 4
        %v1117 = vrot.slane %v1111, 4
        %v1118 = vsel %vm314, %v1116, %v1117
        %v1119 = vrot.slane %v1112, 4
        %v1120 = vsel %vm314, %v1117, %v1119
        %1121 = vrot.lane.b32.xlu0 %v1118, 125
        %v1122 = vpop.permute.xlu0 %1121
        %1123 = vrot.lane.b32.xlu0 %v1120, 125
        %v1124 = vpop.permute.xlu0 %1123
        %v1127 = vadd.f32 %v1106, %v1122
        %v1128 = vadd.f32 %v1107, %v1124
        %s1129 = sld [smem:[#allocation7 + $0x26]]
        %v1130 = vstv %s1129
        %v1131 = vmul.f32 %v1130, %v243
        %v1132 = vmul.f32 %v1130, %v244
        %v1133 = vmul.f32 %v1130, %v245
        %v1137 = vrot.slane %v1131, 5
        %v1138 = vrot.slane %v1132, 5
        %v1139 = vsel %vm332, %v1137, %v1138
        %v1140 = vrot.slane %v1133, 5
        %v1141 = vsel %vm332, %v1138, %v1140
        %1142 = vrot.lane.b32.xlu0 %v1139, 125
        %v1143 = vpop.permute.xlu0 %1142
        %1144 = vrot.lane.b32.xlu0 %v1141, 125
        %v1145 = vpop.permute.xlu0 %1144
        %v1148 = vadd.f32 %v1127, %v1143
        %v1149 = vadd.f32 %v1128, %v1145
        %s1150 = sld [smem:[#allocation7 + $0x2d]]
        %v1151 = vstv %s1150
        %v1152 = vmul.f32 %v1151, %v243
        %v1153 = vmul.f32 %v1151, %v244
        %v1154 = vmul.f32 %v1151, %v245
        %v1158 = vrot.slane %v1152, 6
        %v1159 = vrot.slane %v1153, 6
        %v1160 = vsel %vm350, %v1158, %v1159
        %v1161 = vrot.slane %v1154, 6
        %v1162 = vsel %vm350, %v1159, %v1161
        %1163 = vrot.lane.b32.xlu0 %v1160, 125
        %v1164 = vpop.permute.xlu0 %1163
        %1165 = vrot.lane.b32.xlu0 %v1162, 125
        %v1166 = vpop.permute.xlu0 %1165
        %v1169 = vadd.f32 %v1148, %v1164
        %v1170 = vadd.f32 %v1149, %v1166
        %s1171 = sld [smem:[#allocation7 + $0x34]]
        %v1172 = vstv %s1171
        %v1173 = vmul.f32 %v1172, %v360
        %v1174 = vmul.f32 %v1172, %v361
        %1177 = vrot.lane.b32.xlu0 %v1173, 125
        %v1178 = vpop.permute.xlu0 %1177
        %1179 = vrot.lane.b32.xlu0 %v1174, 125
        %v1180 = vpop.permute.xlu0 %1179
        %v1183 = vadd.f32 %v1169, %v1178
        %v1184 = vadd.f32 %v1170, %v1180
        %s1185 = sld [smem:[#allocation7 + $0x3b]]
        %v1186 = vstv %s1185
        %v1187 = vmul.f32 %v1186, %v360
        %v1188 = vmul.f32 %v1186, %v361
        %v1189 = vmul.f32 %v1186, %v362
        %v1193 = vrot.slane %v1187, 1
        %v1194 = vrot.slane %v1188, 1
        %v1195 = vsel %vm260, %v1193, %v1194
        %v1196 = vrot.slane %v1189, 1
        %v1197 = vsel %vm260, %v1194, %v1196
        %1198 = vrot.lane.b32.xlu0 %v1195, 125
        %v1199 = vpop.permute.xlu0 %1198
        %1200 = vrot.lane.b32.xlu0 %v1197, 125
        %v1201 = vpop.permute.xlu0 %1200
        %v1204 = vadd.f32 %v1183, %v1199
        %v1205 = vadd.f32 %v1184, %v1201
        %s1206 = sld [smem:[#allocation7 + $0x42]]
        %v1207 = vstv %s1206
        %v1208 = vmul.f32 %v1207, %v360
        %v1209 = vmul.f32 %v1207, %v361
        %v1210 = vmul.f32 %v1207, %v362
        %v1214 = vrot.slane %v1208, 2
        %v1215 = vrot.slane %v1209, 2
        %v1216 = vsel %vm278, %v1214, %v1215
        %v1217 = vrot.slane %v1210, 2
        %v1218 = vsel %vm278, %v1215, %v1217
        %1219 = vrot.lane.b32.xlu0 %v1216, 125
        %v1220 = vpop.permute.xlu0 %1219
        %1221 = vrot.lane.b32.xlu0 %v1218, 125
        %v1222 = vpop.permute.xlu0 %1221
        %v1225 = vadd.f32 %v1204, %v1220
        %v1226 = vadd.f32 %v1205, %v1222
        %s1227 = sld [smem:[#allocation7 + $0x49]]
        %v1228 = vstv %s1227
        %v1229 = vmul.f32 %v1228, %v360
        %v1230 = vmul.f32 %v1228, %v361
        %v1231 = vmul.f32 %v1228, %v362
        %v1235 = vrot.slane %v1229, 3
        %v1236 = vrot.slane %v1230, 3
        %v1237 = vsel %vm296, %v1235, %v1236
        %v1238 = vrot.slane %v1231, 3
        %v1239 = vsel %vm296, %v1236, %v1238
        %1240 = vrot.lane.b32.xlu0 %v1237, 125
        %v1241 = vpop.permute.xlu0 %1240
        %1242 = vrot.lane.b32.xlu0 %v1239, 125
        %v1243 = vpop.permute.xlu0 %1242
        %v1246 = vadd.f32 %v1225, %v1241
        %v1247 = vadd.f32 %v1226, %v1243
        %s1248 = sld [smem:[#allocation7 + $0x50]]
        %v1249 = vstv %s1248
        %v1250 = vmul.f32 %v1249, %v360
        %v1251 = vmul.f32 %v1249, %v361
        %v1252 = vmul.f32 %v1249, %v362
        %v1256 = vrot.slane %v1250, 4
        %v1257 = vrot.slane %v1251, 4
        %v1258 = vsel %vm314, %v1256, %v1257
        %v1259 = vrot.slane %v1252, 4
        %v1260 = vsel %vm314, %v1257, %v1259
        %1261 = vrot.lane.b32.xlu0 %v1258, 125
        %v1262 = vpop.permute.xlu0 %1261
        %1263 = vrot.lane.b32.xlu0 %v1260, 125
        %v1264 = vpop.permute.xlu0 %1263
        %v1267 = vadd.f32 %v1246, %v1262
        %v1268 = vadd.f32 %v1247, %v1264
        %s1269 = sld [smem:[#allocation7 + $0x57]]
        %v1270 = vstv %s1269
        %v1271 = vmul.f32 %v1270, %v360
        %v1272 = vmul.f32 %v1270, %v361
        %v1273 = vmul.f32 %v1270, %v362
        %v1277 = vrot.slane %v1271, 5
        %v1278 = vrot.slane %v1272, 5
        %v1279 = vsel %vm332, %v1277, %v1278
        %v1280 = vrot.slane %v1273, 5
        %v1281 = vsel %vm332, %v1278, %v1280
        %1282 = vrot.lane.b32.xlu0 %v1279, 125
        %v1283 = vpop.permute.xlu0 %1282
        %1284 = vrot.lane.b32.xlu0 %v1281, 125
        %v1285 = vpop.permute.xlu0 %1284
        %v1288 = vadd.f32 %v1267, %v1283
        %v1289 = vadd.f32 %v1268, %v1285
        %s1290 = sld [smem:[#allocation7 + $0x5e]]
        %v1291 = vstv %s1290
        %v1292 = vmul.f32 %v1291, %v360
        %v1293 = vmul.f32 %v1291, %v361
        %v1294 = vmul.f32 %v1291, %v362
        %v1298 = vrot.slane %v1292, 6
        %v1299 = vrot.slane %v1293, 6
        %v1300 = vsel %vm350, %v1298, %v1299
        %v1301 = vrot.slane %v1294, 6
        %v1302 = vsel %vm350, %v1299, %v1301
        %1303 = vrot.lane.b32.xlu0 %v1300, 125
        %v1304 = vpop.permute.xlu0 %1303
        %1305 = vrot.lane.b32.xlu0 %v1302, 125
        %v1306 = vpop.permute.xlu0 %1305
        %v1309 = vadd.f32 %v1288, %v1304
        %v1310 = vadd.f32 %v1289, %v1306
        %s1311 = sld [smem:[#allocation7 + $0x4]]
        %v1312 = vstv %s1311
        %v1313 = vmul.f32 %v1312, %v243
        %v1314 = vmul.f32 %v1312, %v244
        %1317 = vrot.lane.b32.xlu0 %v1313, 124
        %v1318 = vpop.permute.xlu0 %1317
        %1319 = vrot.lane.b32.xlu0 %v1314, 124
        %v1320 = vpop.permute.xlu0 %1319
        %v1323 = vadd.f32 %v1309, %v1318
        %v1324 = vadd.f32 %v1310, %v1320
        %s1325 = sld [smem:[#allocation7 + $0xb]]
        %v1326 = vstv %s1325
        %v1327 = vmul.f32 %v1326, %v243
        %v1328 = vmul.f32 %v1326, %v244
        %v1329 = vmul.f32 %v1326, %v245
        %v1333 = vrot.slane %v1327, 1
        %v1334 = vrot.slane %v1328, 1
        %v1335 = vsel %vm260, %v1333, %v1334
        %v1336 = vrot.slane %v1329, 1
        %v1337 = vsel %vm260, %v1334, %v1336
        %1338 = vrot.lane.b32.xlu0 %v1335, 124
        %v1339 = vpop.permute.xlu0 %1338
        %1340 = vrot.lane.b32.xlu0 %v1337, 124
        %v1341 = vpop.permute.xlu0 %1340
        %v1344 = vadd.f32 %v1323, %v1339
        %v1345 = vadd.f32 %v1324, %v1341
        %s1346 = sld [smem:[#allocation7 + $0x12]]
        %v1347 = vstv %s1346
        %v1348 = vmul.f32 %v1347, %v243
        %v1349 = vmul.f32 %v1347, %v244
        %v1350 = vmul.f32 %v1347, %v245
        %v1354 = vrot.slane %v1348, 2
        %v1355 = vrot.slane %v1349, 2
        %v1356 = vsel %vm278, %v1354, %v1355
        %v1357 = vrot.slane %v1350, 2
        %v1358 = vsel %vm278, %v1355, %v1357
        %1359 = vrot.lane.b32.xlu0 %v1356, 124
        %v1360 = vpop.permute.xlu0 %1359
        %1361 = vrot.lane.b32.xlu0 %v1358, 124
        %v1362 = vpop.permute.xlu0 %1361
        %v1365 = vadd.f32 %v1344, %v1360
        %v1366 = vadd.f32 %v1345, %v1362
        %s1367 = sld [smem:[#allocation7 + $0x19]]
        %v1368 = vstv %s1367
        %v1369 = vmul.f32 %v1368, %v243
        %v1370 = vmul.f32 %v1368, %v244
        %v1371 = vmul.f32 %v1368, %v245
        %v1375 = vrot.slane %v1369, 3
        %v1376 = vrot.slane %v1370, 3
        %v1377 = vsel %vm296, %v1375, %v1376
        %v1378 = vrot.slane %v1371, 3
        %v1379 = vsel %vm296, %v1376, %v1378
        %1380 = vrot.lane.b32.xlu0 %v1377, 124
        %v1381 = vpop.permute.xlu0 %1380
        %1382 = vrot.lane.b32.xlu0 %v1379, 124
        %v1383 = vpop.permute.xlu0 %1382
        %v1386 = vadd.f32 %v1365, %v1381
        %v1387 = vadd.f32 %v1366, %v1383
        %s1388 = sld [smem:[#allocation7 + $0x20]]
        %v1389 = vstv %s1388
        %v1390 = vmul.f32 %v1389, %v243
        %v1391 = vmul.f32 %v1389, %v244
        %v1392 = vmul.f32 %v1389, %v245
        %v1396 = vrot.slane %v1390, 4
        %v1397 = vrot.slane %v1391, 4
        %v1398 = vsel %vm314, %v1396, %v1397
        %v1399 = vrot.slane %v1392, 4
        %v1400 = vsel %vm314, %v1397, %v1399
        %1401 = vrot.lane.b32.xlu0 %v1398, 124
        %v1402 = vpop.permute.xlu0 %1401
        %1403 = vrot.lane.b32.xlu0 %v1400, 124
        %v1404 = vpop.permute.xlu0 %1403
        %v1407 = vadd.f32 %v1386, %v1402
        %v1408 = vadd.f32 %v1387, %v1404
        %s1409 = sld [smem:[#allocation7 + $0x27]]
        %v1410 = vstv %s1409
        %v1411 = vmul.f32 %v1410, %v243
        %v1412 = vmul.f32 %v1410, %v244
        %v1413 = vmul.f32 %v1410, %v245
        %v1417 = vrot.slane %v1411, 5
        %v1418 = vrot.slane %v1412, 5
        %v1419 = vsel %vm332, %v1417, %v1418
        %v1420 = vrot.slane %v1413, 5
        %v1421 = vsel %vm332, %v1418, %v1420
        %1422 = vrot.lane.b32.xlu0 %v1419, 124
        %v1423 = vpop.permute.xlu0 %1422
        %1424 = vrot.lane.b32.xlu0 %v1421, 124
        %v1425 = vpop.permute.xlu0 %1424
        %v1428 = vadd.f32 %v1407, %v1423
        %v1429 = vadd.f32 %v1408, %v1425
        %s1430 = sld [smem:[#allocation7 + $0x2e]]
        %v1431 = vstv %s1430
        %v1432 = vmul.f32 %v1431, %v243
        %v1433 = vmul.f32 %v1431, %v244
        %v1434 = vmul.f32 %v1431, %v245
        %v1438 = vrot.slane %v1432, 6
        %v1439 = vrot.slane %v1433, 6
        %v1440 = vsel %vm350, %v1438, %v1439
        %v1441 = vrot.slane %v1434, 6
        %v1442 = vsel %vm350, %v1439, %v1441
        %1443 = vrot.lane.b32.xlu0 %v1440, 124
        %v1444 = vpop.permute.xlu0 %1443
        %1445 = vrot.lane.b32.xlu0 %v1442, 124
        %v1446 = vpop.permute.xlu0 %1445
        %v1449 = vadd.f32 %v1428, %v1444
        %v1450 = vadd.f32 %v1429, %v1446
        %s1451 = sld [smem:[#allocation7 + $0x35]]
        %v1452 = vstv %s1451
        %v1453 = vmul.f32 %v1452, %v360
        %v1454 = vmul.f32 %v1452, %v361
        %1457 = vrot.lane.b32.xlu0 %v1453, 124
        %v1458 = vpop.permute.xlu0 %1457
        %1459 = vrot.lane.b32.xlu0 %v1454, 124
        %v1460 = vpop.permute.xlu0 %1459
        %v1463 = vadd.f32 %v1449, %v1458
        %v1464 = vadd.f32 %v1450, %v1460
        %s1465 = sld [smem:[#allocation7 + $0x3c]]
        %v1466 = vstv %s1465
        %v1467 = vmul.f32 %v1466, %v360
        %v1468 = vmul.f32 %v1466, %v361
        %v1469 = vmul.f32 %v1466, %v362
        %v1473 = vrot.slane %v1467, 1
        %v1474 = vrot.slane %v1468, 1
        %v1475 = vsel %vm260, %v1473, %v1474
        %v1476 = vrot.slane %v1469, 1
        %v1477 = vsel %vm260, %v1474, %v1476
        %1478 = vrot.lane.b32.xlu0 %v1475, 124
        %v1479 = vpop.permute.xlu0 %1478
        %1480 = vrot.lane.b32.xlu0 %v1477, 124
        %v1481 = vpop.permute.xlu0 %1480
        %v1484 = vadd.f32 %v1463, %v1479
        %v1485 = vadd.f32 %v1464, %v1481
        %s1486 = sld [smem:[#allocation7 + $0x43]]
        %v1487 = vstv %s1486
        %v1488 = vmul.f32 %v1487, %v360
        %v1489 = vmul.f32 %v1487, %v361
        %v1490 = vmul.f32 %v1487, %v362
        %v1494 = vrot.slane %v1488, 2
        %v1495 = vrot.slane %v1489, 2
        %v1496 = vsel %vm278, %v1494, %v1495
        %v1497 = vrot.slane %v1490, 2
        %v1498 = vsel %vm278, %v1495, %v1497
        %1499 = vrot.lane.b32.xlu0 %v1496, 124
        %v1500 = vpop.permute.xlu0 %1499
        %1501 = vrot.lane.b32.xlu0 %v1498, 124
        %v1502 = vpop.permute.xlu0 %1501
        %v1505 = vadd.f32 %v1484, %v1500
        %v1506 = vadd.f32 %v1485, %v1502
        %s1507 = sld [smem:[#allocation7 + $0x4a]]
        %v1508 = vstv %s1507
        %v1509 = vmul.f32 %v1508, %v360
        %v1510 = vmul.f32 %v1508, %v361
        %v1511 = vmul.f32 %v1508, %v362
        %v1515 = vrot.slane %v1509, 3
        %v1516 = vrot.slane %v1510, 3
        %v1517 = vsel %vm296, %v1515, %v1516
        %v1518 = vrot.slane %v1511, 3
        %v1519 = vsel %vm296, %v1516, %v1518
        %1520 = vrot.lane.b32.xlu0 %v1517, 124
        %v1521 = vpop.permute.xlu0 %1520
        %1522 = vrot.lane.b32.xlu0 %v1519, 124
        %v1523 = vpop.permute.xlu0 %1522
        %v1526 = vadd.f32 %v1505, %v1521
        %v1527 = vadd.f32 %v1506, %v1523
        %s1528 = sld [smem:[#allocation7 + $0x51]]
        %v1529 = vstv %s1528
        %v1530 = vmul.f32 %v1529, %v360
        %v1531 = vmul.f32 %v1529, %v361
        %v1532 = vmul.f32 %v1529, %v362
        %v1536 = vrot.slane %v1530, 4
        %v1537 = vrot.slane %v1531, 4
        %v1538 = vsel %vm314, %v1536, %v1537
        %v1539 = vrot.slane %v1532, 4
        %v1540 = vsel %vm314, %v1537, %v1539
        %1541 = vrot.lane.b32.xlu0 %v1538, 124
        %v1542 = vpop.permute.xlu0 %1541
        %1543 = vrot.lane.b32.xlu0 %v1540, 124
        %v1544 = vpop.permute.xlu0 %1543
        %v1547 = vadd.f32 %v1526, %v1542
        %v1548 = vadd.f32 %v1527, %v1544
        %s1549 = sld [smem:[#allocation7 + $0x58]]
        %v1550 = vstv %s1549
        %v1551 = vmul.f32 %v1550, %v360
        %v1552 = vmul.f32 %v1550, %v361
        %v1553 = vmul.f32 %v1550, %v362
        %v1557 = vrot.slane %v1551, 5
        %v1558 = vrot.slane %v1552, 5
        %v1559 = vsel %vm332, %v1557, %v1558
        %v1560 = vrot.slane %v1553, 5
        %v1561 = vsel %vm332, %v1558, %v1560
        %1562 = vrot.lane.b32.xlu0 %v1559, 124
        %v1563 = vpop.permute.xlu0 %1562
        %1564 = vrot.lane.b32.xlu0 %v1561, 124
        %v1565 = vpop.permute.xlu0 %1564
        %v1568 = vadd.f32 %v1547, %v1563
        %v1569 = vadd.f32 %v1548, %v1565
        %s1570 = sld [smem:[#allocation7 + $0x5f]]
        %v1571 = vstv %s1570
        %v1572 = vmul.f32 %v1571, %v360
        %v1573 = vmul.f32 %v1571, %v361
        %v1574 = vmul.f32 %v1571, %v362
        %v1578 = vrot.slane %v1572, 6
        %v1579 = vrot.slane %v1573, 6
        %v1580 = vsel %vm350, %v1578, %v1579
        %v1581 = vrot.slane %v1574, 6
        %v1582 = vsel %vm350, %v1579, %v1581
        %1583 = vrot.lane.b32.xlu0 %v1580, 124
        %v1584 = vpop.permute.xlu0 %1583
        %1585 = vrot.lane.b32.xlu0 %v1582, 124
        %v1586 = vpop.permute.xlu0 %1585
        %v1589 = vadd.f32 %v1568, %v1584
        %v1590 = vadd.f32 %v1569, %v1586
        %s1591 = sld [smem:[#allocation7 + $0x5]]
        %v1592 = vstv %s1591
        %v1593 = vmul.f32 %v1592, %v243
        %v1594 = vmul.f32 %v1592, %v244
        %1597 = vrot.lane.b32.xlu0 %v1593, 123
        %v1598 = vpop.permute.xlu0 %1597
        %1599 = vrot.lane.b32.xlu0 %v1594, 123
        %v1600 = vpop.permute.xlu0 %1599
        %v1603 = vadd.f32 %v1589, %v1598
        %v1604 = vadd.f32 %v1590, %v1600
        %s1605 = sld [smem:[#allocation7 + $0xc]]
        %v1606 = vstv %s1605
        %v1607 = vmul.f32 %v1606, %v243
        %v1608 = vmul.f32 %v1606, %v244
        %v1609 = vmul.f32 %v1606, %v245
        %v1613 = vrot.slane %v1607, 1
        %v1614 = vrot.slane %v1608, 1
        %v1615 = vsel %vm260, %v1613, %v1614
        %v1616 = vrot.slane %v1609, 1
        %v1617 = vsel %vm260, %v1614, %v1616
        %1618 = vrot.lane.b32.xlu0 %v1615, 123
        %v1619 = vpop.permute.xlu0 %1618
        %1620 = vrot.lane.b32.xlu0 %v1617, 123
        %v1621 = vpop.permute.xlu0 %1620
        %v1624 = vadd.f32 %v1603, %v1619
        %v1625 = vadd.f32 %v1604, %v1621
        %s1626 = sld [smem:[#allocation7 + $0x13]]
        %v1627 = vstv %s1626
        %v1628 = vmul.f32 %v1627, %v243
        %v1629 = vmul.f32 %v1627, %v244
        %v1630 = vmul.f32 %v1627, %v245
        %v1634 = vrot.slane %v1628, 2
        %v1635 = vrot.slane %v1629, 2
        %v1636 = vsel %vm278, %v1634, %v1635
        %v1637 = vrot.slane %v1630, 2
        %v1638 = vsel %vm278, %v1635, %v1637
        %1639 = vrot.lane.b32.xlu0 %v1636, 123
        %v1640 = vpop.permute.xlu0 %1639
        %1641 = vrot.lane.b32.xlu0 %v1638, 123
        %v1642 = vpop.permute.xlu0 %1641
        %v1645 = vadd.f32 %v1624, %v1640
        %v1646 = vadd.f32 %v1625, %v1642
        %s1647 = sld [smem:[#allocation7 + $0x1a]]
        %v1648 = vstv %s1647
        %v1649 = vmul.f32 %v1648, %v243
        %v1650 = vmul.f32 %v1648, %v244
        %v1651 = vmul.f32 %v1648, %v245
        %v1655 = vrot.slane %v1649, 3
        %v1656 = vrot.slane %v1650, 3
        %v1657 = vsel %vm296, %v1655, %v1656
        %v1658 = vrot.slane %v1651, 3
        %v1659 = vsel %vm296, %v1656, %v1658
        %1660 = vrot.lane.b32.xlu0 %v1657, 123
        %v1661 = vpop.permute.xlu0 %1660
        %1662 = vrot.lane.b32.xlu0 %v1659, 123
        %v1663 = vpop.permute.xlu0 %1662
        %v1666 = vadd.f32 %v1645, %v1661
        %v1667 = vadd.f32 %v1646, %v1663
        %s1668 = sld [smem:[#allocation7 + $0x21]]
        %v1669 = vstv %s1668
        %v1670 = vmul.f32 %v1669, %v243
        %v1671 = vmul.f32 %v1669, %v244
        %v1672 = vmul.f32 %v1669, %v245
        %v1676 = vrot.slane %v1670, 4
        %v1677 = vrot.slane %v1671, 4
        %v1678 = vsel %vm314, %v1676, %v1677
        %v1679 = vrot.slane %v1672, 4
        %v1680 = vsel %vm314, %v1677, %v1679
        %1681 = vrot.lane.b32.xlu0 %v1678, 123
        %v1682 = vpop.permute.xlu0 %1681
        %1683 = vrot.lane.b32.xlu0 %v1680, 123
        %v1684 = vpop.permute.xlu0 %1683
        %v1687 = vadd.f32 %v1666, %v1682
        %v1688 = vadd.f32 %v1667, %v1684
        %s1689 = sld [smem:[#allocation7 + $0x28]]
        %v1690 = vstv %s1689
        %v1691 = vmul.f32 %v1690, %v243
        %v1692 = vmul.f32 %v1690, %v244
        %v1693 = vmul.f32 %v1690, %v245
        %v1697 = vrot.slane %v1691, 5
        %v1698 = vrot.slane %v1692, 5
        %v1699 = vsel %vm332, %v1697, %v1698
        %v1700 = vrot.slane %v1693, 5
        %v1701 = vsel %vm332, %v1698, %v1700
        %1702 = vrot.lane.b32.xlu0 %v1699, 123
        %v1703 = vpop.permute.xlu0 %1702
        %1704 = vrot.lane.b32.xlu0 %v1701, 123
        %v1705 = vpop.permute.xlu0 %1704
        %v1708 = vadd.f32 %v1687, %v1703
        %v1709 = vadd.f32 %v1688, %v1705
        %s1710 = sld [smem:[#allocation7 + $0x2f]]
        %v1711 = vstv %s1710
        %v1712 = vmul.f32 %v1711, %v243
        %v1713 = vmul.f32 %v1711, %v244
        %v1714 = vmul.f32 %v1711, %v245
        %v1718 = vrot.slane %v1712, 6
        %v1719 = vrot.slane %v1713, 6
        %v1720 = vsel %vm350, %v1718, %v1719
        %v1721 = vrot.slane %v1714, 6
        %v1722 = vsel %vm350, %v1719, %v1721
        %1723 = vrot.lane.b32.xlu0 %v1720, 123
        %v1724 = vpop.permute.xlu0 %1723
        %1725 = vrot.lane.b32.xlu0 %v1722, 123
        %v1726 = vpop.permute.xlu0 %1725
        %v1729 = vadd.f32 %v1708, %v1724
        %v1730 = vadd.f32 %v1709, %v1726
        %s1731 = sld [smem:[#allocation7 + $0x36]]
        %v1732 = vstv %s1731
        %v1733 = vmul.f32 %v1732, %v360
        %v1734 = vmul.f32 %v1732, %v361
        %1737 = vrot.lane.b32.xlu0 %v1733, 123
        %v1738 = vpop.permute.xlu0 %1737
        %1739 = vrot.lane.b32.xlu0 %v1734, 123
        %v1740 = vpop.permute.xlu0 %1739
        %v1743 = vadd.f32 %v1729, %v1738
        %v1744 = vadd.f32 %v1730, %v1740
        %s1745 = sld [smem:[#allocation7 + $0x3d]]
        %v1746 = vstv %s1745
        %v1747 = vmul.f32 %v1746, %v360
        %v1748 = vmul.f32 %v1746, %v361
        %v1749 = vmul.f32 %v1746, %v362
        %v1753 = vrot.slane %v1747, 1
        %v1754 = vrot.slane %v1748, 1
        %v1755 = vsel %vm260, %v1753, %v1754
        %v1756 = vrot.slane %v1749, 1
        %v1757 = vsel %vm260, %v1754, %v1756
        %1758 = vrot.lane.b32.xlu0 %v1755, 123
        %v1759 = vpop.permute.xlu0 %1758
        %1760 = vrot.lane.b32.xlu0 %v1757, 123
        %v1761 = vpop.permute.xlu0 %1760
        %v1764 = vadd.f32 %v1743, %v1759
        %v1765 = vadd.f32 %v1744, %v1761
        %s1766 = sld [smem:[#allocation7 + $0x44]]
        %v1767 = vstv %s1766
        %v1768 = vmul.f32 %v1767, %v360
        %v1769 = vmul.f32 %v1767, %v361
        %v1770 = vmul.f32 %v1767, %v362
        %v1774 = vrot.slane %v1768, 2
        %v1775 = vrot.slane %v1769, 2
        %v1776 = vsel %vm278, %v1774, %v1775
        %v1777 = vrot.slane %v1770, 2
        %v1778 = vsel %vm278, %v1775, %v1777
        %1779 = vrot.lane.b32.xlu0 %v1776, 123
        %v1780 = vpop.permute.xlu0 %1779
        %1781 = vrot.lane.b32.xlu0 %v1778, 123
        %v1782 = vpop.permute.xlu0 %1781
        %v1785 = vadd.f32 %v1764, %v1780
        %v1786 = vadd.f32 %v1765, %v1782
        %s1787 = sld [smem:[#allocation7 + $0x4b]]
        %v1788 = vstv %s1787
        %v1789 = vmul.f32 %v1788, %v360
        %v1790 = vmul.f32 %v1788, %v361
        %v1791 = vmul.f32 %v1788, %v362
        %v1795 = vrot.slane %v1789, 3
        %v1796 = vrot.slane %v1790, 3
        %v1797 = vsel %vm296, %v1795, %v1796
        %v1798 = vrot.slane %v1791, 3
        %v1799 = vsel %vm296, %v1796, %v1798
        %1800 = vrot.lane.b32.xlu0 %v1797, 123
        %v1801 = vpop.permute.xlu0 %1800
        %1802 = vrot.lane.b32.xlu0 %v1799, 123
        %v1803 = vpop.permute.xlu0 %1802
        %v1806 = vadd.f32 %v1785, %v1801
        %v1807 = vadd.f32 %v1786, %v1803
        %s1808 = sld [smem:[#allocation7 + $0x52]]
        %v1809 = vstv %s1808
        %v1810 = vmul.f32 %v1809, %v360
        %v1811 = vmul.f32 %v1809, %v361
        %v1812 = vmul.f32 %v1809, %v362
        %v1816 = vrot.slane %v1810, 4
        %v1817 = vrot.slane %v1811, 4
        %v1818 = vsel %vm314, %v1816, %v1817
        %v1819 = vrot.slane %v1812, 4
        %v1820 = vsel %vm314, %v1817, %v1819
        %1821 = vrot.lane.b32.xlu0 %v1818, 123
        %v1822 = vpop.permute.xlu0 %1821
        %1823 = vrot.lane.b32.xlu0 %v1820, 123
        %v1824 = vpop.permute.xlu0 %1823
        %v1827 = vadd.f32 %v1806, %v1822
        %v1828 = vadd.f32 %v1807, %v1824
        %s1829 = sld [smem:[#allocation7 + $0x59]]
        %v1830 = vstv %s1829
        %v1831 = vmul.f32 %v1830, %v360
        %v1832 = vmul.f32 %v1830, %v361
        %v1833 = vmul.f32 %v1830, %v362
        %v1837 = vrot.slane %v1831, 5
        %v1838 = vrot.slane %v1832, 5
        %v1839 = vsel %vm332, %v1837, %v1838
        %v1840 = vrot.slane %v1833, 5
        %v1841 = vsel %vm332, %v1838, %v1840
        %1842 = vrot.lane.b32.xlu0 %v1839, 123
        %v1843 = vpop.permute.xlu0 %1842
        %1844 = vrot.lane.b32.xlu0 %v1841, 123
        %v1845 = vpop.permute.xlu0 %1844
        %v1848 = vadd.f32 %v1827, %v1843
        %v1849 = vadd.f32 %v1828, %v1845
        %s1850 = sld [smem:[#allocation7 + $0x60]]
        %v1851 = vstv %s1850
        %v1852 = vmul.f32 %v1851, %v360
        %v1853 = vmul.f32 %v1851, %v361
        %v1854 = vmul.f32 %v1851, %v362
        %v1858 = vrot.slane %v1852, 6
        %v1859 = vrot.slane %v1853, 6
        %v1860 = vsel %vm350, %v1858, %v1859
        %v1861 = vrot.slane %v1854, 6
        %v1862 = vsel %vm350, %v1859, %v1861
        %1863 = vrot.lane.b32.xlu0 %v1860, 123
        %v1864 = vpop.permute.xlu0 %1863
        %1865 = vrot.lane.b32.xlu0 %v1862, 123
        %v1866 = vpop.permute.xlu0 %1865
        %v1869 = vadd.f32 %v1848, %v1864
        %v1870 = vadd.f32 %v1849, %v1866
        %s1871 = sld [smem:[#allocation7 + $0x6]]
        %v1872 = vstv %s1871
        %v1873 = vmul.f32 %v1872, %v243
        %v1874 = vmul.f32 %v1872, %v244
        %1877 = vrot.lane.b32.xlu0 %v1873, 122
        %v1878 = vpop.permute.xlu0 %1877
        %1879 = vrot.lane.b32.xlu0 %v1874, 122
        %v1880 = vpop.permute.xlu0 %1879
        %v1883 = vadd.f32 %v1869, %v1878
        %v1884 = vadd.f32 %v1870, %v1880
        %s1885 = sld [smem:[#allocation7 + $0xd]]
        %v1886 = vstv %s1885
        %v1887 = vmul.f32 %v1886, %v243
        %v1888 = vmul.f32 %v1886, %v244
        %v1889 = vmul.f32 %v1886, %v245
        %v1893 = vrot.slane %v1887, 1
        %v1894 = vrot.slane %v1888, 1
        %v1895 = vsel %vm260, %v1893, %v1894
        %v1896 = vrot.slane %v1889, 1
        %v1897 = vsel %vm260, %v1894, %v1896
        %1898 = vrot.lane.b32.xlu0 %v1895, 122
        %v1899 = vpop.permute.xlu0 %1898
        %1900 = vrot.lane.b32.xlu0 %v1897, 122
        %v1901 = vpop.permute.xlu0 %1900
        %v1904 = vadd.f32 %v1883, %v1899
        %v1905 = vadd.f32 %v1884, %v1901
        %s1906 = sld [smem:[#allocation7 + $0x14]]
        %v1907 = vstv %s1906
        %v1908 = vmul.f32 %v1907, %v243
        %v1909 = vmul.f32 %v1907, %v244
        %v1910 = vmul.f32 %v1907, %v245
        %v1914 = vrot.slane %v1908, 2
        %v1915 = vrot.slane %v1909, 2
        %v1916 = vsel %vm278, %v1914, %v1915
        %v1917 = vrot.slane %v1910, 2
        %v1918 = vsel %vm278, %v1915, %v1917
        %1919 = vrot.lane.b32.xlu0 %v1916, 122
        %v1920 = vpop.permute.xlu0 %1919
        %1921 = vrot.lane.b32.xlu0 %v1918, 122
        %v1922 = vpop.permute.xlu0 %1921
        %v1925 = vadd.f32 %v1904, %v1920
        %v1926 = vadd.f32 %v1905, %v1922
        %s1927 = sld [smem:[#allocation7 + $0x1b]]
        %v1928 = vstv %s1927
        %v1929 = vmul.f32 %v1928, %v243
        %v1930 = vmul.f32 %v1928, %v244
        %v1931 = vmul.f32 %v1928, %v245
        %v1935 = vrot.slane %v1929, 3
        %v1936 = vrot.slane %v1930, 3
        %v1937 = vsel %vm296, %v1935, %v1936
        %v1938 = vrot.slane %v1931, 3
        %v1939 = vsel %vm296, %v1936, %v1938
        %1940 = vrot.lane.b32.xlu0 %v1937, 122
        %v1941 = vpop.permute.xlu0 %1940
        %1942 = vrot.lane.b32.xlu0 %v1939, 122
        %v1943 = vpop.permute.xlu0 %1942
        %v1946 = vadd.f32 %v1925, %v1941
        %v1947 = vadd.f32 %v1926, %v1943
        %s1948 = sld [smem:[#allocation7 + $0x22]]
        %v1949 = vstv %s1948
        %v1950 = vmul.f32 %v1949, %v243
        %v1951 = vmul.f32 %v1949, %v244
        %v1952 = vmul.f32 %v1949, %v245
        %v1956 = vrot.slane %v1950, 4
        %v1957 = vrot.slane %v1951, 4
        %v1958 = vsel %vm314, %v1956, %v1957
        %v1959 = vrot.slane %v1952, 4
        %v1960 = vsel %vm314, %v1957, %v1959
        %1961 = vrot.lane.b32.xlu0 %v1958, 122
        %v1962 = vpop.permute.xlu0 %1961
        %1963 = vrot.lane.b32.xlu0 %v1960, 122
        %v1964 = vpop.permute.xlu0 %1963
        %v1967 = vadd.f32 %v1946, %v1962
        %v1968 = vadd.f32 %v1947, %v1964
        %s1969 = sld [smem:[#allocation7 + $0x29]]
        %v1970 = vstv %s1969
        %v1971 = vmul.f32 %v1970, %v243
        %v1972 = vmul.f32 %v1970, %v244
        %v1973 = vmul.f32 %v1970, %v245
        %v1977 = vrot.slane %v1971, 5
        %v1978 = vrot.slane %v1972, 5
        %v1979 = vsel %vm332, %v1977, %v1978
        %v1980 = vrot.slane %v1973, 5
        %v1981 = vsel %vm332, %v1978, %v1980
        %1982 = vrot.lane.b32.xlu0 %v1979, 122
        %v1983 = vpop.permute.xlu0 %1982
        %1984 = vrot.lane.b32.xlu0 %v1981, 122
        %v1985 = vpop.permute.xlu0 %1984
        %v1988 = vadd.f32 %v1967, %v1983
        %v1989 = vadd.f32 %v1968, %v1985
        %s1990 = sld [smem:[#allocation7 + $0x30]]
        %v1991 = vstv %s1990
        %v1992 = vmul.f32 %v1991, %v243
        %v1993 = vmul.f32 %v1991, %v244
        %v1994 = vmul.f32 %v1991, %v245
        %v1998 = vrot.slane %v1992, 6
        %v1999 = vrot.slane %v1993, 6
        %v2000 = vsel %vm350, %v1998, %v1999
        %v2001 = vrot.slane %v1994, 6
        %v2002 = vsel %vm350, %v1999, %v2001
        %2003 = vrot.lane.b32.xlu0 %v2000, 122
        %v2004 = vpop.permute.xlu0 %2003
        %2005 = vrot.lane.b32.xlu0 %v2002, 122
        %v2006 = vpop.permute.xlu0 %2005
        %v2009 = vadd.f32 %v1988, %v2004
        %v2010 = vadd.f32 %v1989, %v2006
        %s2011 = sld [smem:[#allocation7 + $0x37]]
        %v2012 = vstv %s2011
        %v2013 = vmul.f32 %v2012, %v360
        %v2014 = vmul.f32 %v2012, %v361
        %2017 = vrot.lane.b32.xlu0 %v2013, 122
        %v2018 = vpop.permute.xlu0 %2017
        %2019 = vrot.lane.b32.xlu0 %v2014, 122
        %v2020 = vpop.permute.xlu0 %2019
        %v2023 = vadd.f32 %v2009, %v2018
        %v2024 = vadd.f32 %v2010, %v2020
        %s2025 = sld [smem:[#allocation7 + $0x3e]]
        %v2026 = vstv %s2025
        %v2027 = vmul.f32 %v2026, %v360
        %v2028 = vmul.f32 %v2026, %v361
        %v2029 = vmul.f32 %v2026, %v362
        %v2033 = vrot.slane %v2027, 1
        %v2034 = vrot.slane %v2028, 1
        %v2035 = vsel %vm260, %v2033, %v2034
        %v2036 = vrot.slane %v2029, 1
        %v2037 = vsel %vm260, %v2034, %v2036
        %2038 = vrot.lane.b32.xlu0 %v2035, 122
        %v2039 = vpop.permute.xlu0 %2038
        %2040 = vrot.lane.b32.xlu0 %v2037, 122
        %v2041 = vpop.permute.xlu0 %2040
        %v2044 = vadd.f32 %v2023, %v2039
        %v2045 = vadd.f32 %v2024, %v2041
        %s2046 = sld [smem:[#allocation7 + $0x45]]
        %v2047 = vstv %s2046
        %v2048 = vmul.f32 %v2047, %v360
        %v2049 = vmul.f32 %v2047, %v361
        %v2050 = vmul.f32 %v2047, %v362
        %v2054 = vrot.slane %v2048, 2
        %v2055 = vrot.slane %v2049, 2
        %v2056 = vsel %vm278, %v2054, %v2055
        %v2057 = vrot.slane %v2050, 2
        %v2058 = vsel %vm278, %v2055, %v2057
        %2059 = vrot.lane.b32.xlu0 %v2056, 122
        %v2060 = vpop.permute.xlu0 %2059
        %2061 = vrot.lane.b32.xlu0 %v2058, 122
        %v2062 = vpop.permute.xlu0 %2061
        %v2065 = vadd.f32 %v2044, %v2060
        %v2066 = vadd.f32 %v2045, %v2062
        %s2067 = sld [smem:[#allocation7 + $0x4c]]
        %v2068 = vstv %s2067
        %v2069 = vmul.f32 %v2068, %v360
        %v2070 = vmul.f32 %v2068, %v361
        %v2071 = vmul.f32 %v2068, %v362
        %v2075 = vrot.slane %v2069, 3
        %v2076 = vrot.slane %v2070, 3
        %v2077 = vsel %vm296, %v2075, %v2076
        %v2078 = vrot.slane %v2071, 3
        %v2079 = vsel %vm296, %v2076, %v2078
        %2080 = vrot.lane.b32.xlu0 %v2077, 122
        %v2081 = vpop.permute.xlu0 %2080
        %2082 = vrot.lane.b32.xlu0 %v2079, 122
        %v2083 = vpop.permute.xlu0 %2082
        %v2086 = vadd.f32 %v2065, %v2081
        %v2087 = vadd.f32 %v2066, %v2083
        %s2088 = sld [smem:[#allocation7 + $0x53]]
        %v2089 = vstv %s2088
        %v2090 = vmul.f32 %v2089, %v360
        %v2091 = vmul.f32 %v2089, %v361
        %v2092 = vmul.f32 %v2089, %v362
        %v2096 = vrot.slane %v2090, 4
        %v2097 = vrot.slane %v2091, 4
        %v2098 = vsel %vm314, %v2096, %v2097
        %v2099 = vrot.slane %v2092, 4
        %v2100 = vsel %vm314, %v2097, %v2099
        %2101 = vrot.lane.b32.xlu0 %v2098, 122
        %v2102 = vpop.permute.xlu0 %2101
        %2103 = vrot.lane.b32.xlu0 %v2100, 122
        %v2104 = vpop.permute.xlu0 %2103
        %v2107 = vadd.f32 %v2086, %v2102
        %v2108 = vadd.f32 %v2087, %v2104
        %s2109 = sld [smem:[#allocation7 + $0x5a]]
        %v2110 = vstv %s2109
        %v2111 = vmul.f32 %v2110, %v360
        %v2112 = vmul.f32 %v2110, %v361
        %v2113 = vmul.f32 %v2110, %v362
        %v2117 = vrot.slane %v2111, 5
        %v2118 = vrot.slane %v2112, 5
        %v2119 = vsel %vm332, %v2117, %v2118
        %v2120 = vrot.slane %v2113, 5
        %v2121 = vsel %vm332, %v2118, %v2120
        %2122 = vrot.lane.b32.xlu0 %v2119, 122
        %v2123 = vpop.permute.xlu0 %2122
        %2124 = vrot.lane.b32.xlu0 %v2121, 122
        %v2125 = vpop.permute.xlu0 %2124
        %v2128 = vadd.f32 %v2107, %v2123
        %v2129 = vadd.f32 %v2108, %v2125
        %s2130 = sld [smem:[#allocation7 + $0x61]]
        %v2131 = vstv %s2130
        %v2132 = vmul.f32 %v2131, %v360
        %v2133 = vmul.f32 %v2131, %v361
        %v2134 = vmul.f32 %v2131, %v362
        %v2138 = vrot.slane %v2132, 6
        %v2139 = vrot.slane %v2133, 6
        %v2140 = vsel %vm350, %v2138, %v2139
        %v2141 = vrot.slane %v2134, 6
        %v2142 = vsel %vm350, %v2139, %v2141
        %2143 = vrot.lane.b32.xlu0 %v2140, 122
        %v2144 = vpop.permute.xlu0 %2143
        %2145 = vrot.lane.b32.xlu0 %v2142, 122
        %v2146 = vpop.permute.xlu0 %2145
        %v2149 = vadd.f32 %v2128, %v2144
        %v2150 = vadd.f32 %v2129, %v2146
        %v2151 = vxor.u32 %v2149, 2147483648
        %v2152 = vxor.u32 %v2150, 2147483648
        %v2153 = vmul.f32 %v2151, 1.442695
        %v2154 = vpow.pop %v2153
        %v2155 = vmul.f32 %v2152, 1.442695
        %v2156 = vpow.pop %v2155
        %v2157 = vadd.f32 %v2154, 1.0
        %v2158 = vadd.f32 %v2156, 1.0
        %v2159 = vrcp.pop %v2157
        %v2160 = vmul.f32 1.0, %v2159
        %v2161 = vrcp.pop %v2158
        %v2162 = vmul.f32 1.0, %v2161
        %2163 = vst.msk [vmem:[%s175] sm:$0xff] %vm184, %v2160
        %2164 = vst.msk [vmem:[%s175 + $0x8] sm:$0xff] %vm184, %v2162
        %s2165 = sand.u32 %s75, 1
        %s2166 = scalar_lea.sflag [#allocation5], %s2165
        %s2167 = sand.u32 %s75, 1
        %s2168 = smul.addr %s2167, 16
        %s2169 = scalar_lea.vmem [#allocation8], %s2168
        // Predicated region
        $region37: #{tpu_custom_call.1} parent=27 // pred_check
          %p2170 = pneg %p85
        $region38: #{tpu_custom_call.1} parent=27 // pred_check_branch
          %2172 = sbr.rel (%p2170) target = $region40
        $region39: #{tpu_custom_call.1} parent=27 // pred_region
          %s2174 = ssub.s32 256, 256
          %2175 = vsyncadd %s2166, %s2174
          %s2176 = smul.addr %s20, 2
          %s2177 = smul.addr %s2176, 128
          %s2178 = scalar_lea.hbm %s2, %s2177
          %s2179 = sshll.u32 %s2169, 4
          %s2180 = int_to_ptr.vmem [resolvable:$true] %s2179
          %2185 = dma.vmem_to_hbm [thread:$0]  %s2180, 256, %s2178, %s2166, 128, 128, 8
        $region40: #{tpu_custom_call.1} parent=27 // pred_fallthru
          _
      $region28: #{tpu_custom_call.1} parent=5 // pred_fallthru
        _
      %p2186 = scmp.le.s32.totalorder 2, %s15
      // Predicated region
      $region41: #{tpu_custom_call.1} parent=5 // pred_check
        %p2187 = pneg %p2186
      $region42: #{tpu_custom_call.1} parent=5 // pred_check_branch
        %2189 = sbr.rel (%p2187) target = $region44
      $region43: #{tpu_custom_call.1} parent=5 // pred_region
        %s2190 = ssub.s32 %s15, 2
        // Predicated region
        $region45: #{tpu_custom_call.1} parent=43 // pred_check
          %p2191 = pneg %p91
        $region46: #{tpu_custom_call.1} parent=43 // pred_check_branch
          %2193 = sbr.rel (%p2191) target = $region48
        $region47: #{tpu_custom_call.1} parent=43 // pred_region
          %s2194 = sand.u32 %s76, 1
          %s2195 = scalar_lea.sflag [#allocation5], %s2194
          %s2196 = sand.u32 %s76, 1
          %s2197 = smul.addr %s2196, 16
          %s2198 = scalar_lea.vmem [#allocation8], %s2197
          %2199 = dma.done %s2195, 256
        $region48: #{tpu_custom_call.1} parent=43 // pred_fallthru
          _
      $region44: #{tpu_custom_call.1} parent=5 // pred_fallthru
        _
    $region6: #{tpu_custom_call.1} parent=1 // loop_footer
      %s19 = sadd.s32 1, %s15
    $region7: #{tpu_custom_call.1} parent=1 // loop_footer_branch
      %14 = sbr.rel target = $region3
    $region8: #{tpu_custom_call.1} parent=1 // loop_exit
      _
    %2200 = vsyncpa [#allocation4], 1
    %s2201 = scalar_lea.sflag [#allocation4], 1
    %2202 = vsyncpa %s2201, 1
    %2203 = vsyncpa [#allocation5], 1
    %s2204 = scalar_lea.sflag [#allocation5], 1
    %2205 = vsyncpa %s2204, 1
    %2206 = vsyncpa [#allocation6], 1
    %s2207 = scalar_lea.sflag [#allocation6], 1
    %2208 = vsyncpa %s2207, 1

</llo_original>
